<compile_context>
chip_gen: v7x
topology: tpu7x:2x2x1
jax: 0.10.0
libtpu: 0.0.40
codegen_flags: <defaults>
</compile_context>

<pallas_src>
import jax
import jax.numpy as jnp
from jax.experimental import pallas as pl
from jax.experimental.pallas import tpu as pltpu

HIDDEN = 32
NUM_LAYERS = 3
PAIRNORM_EPS = 1e-5
NEG_INF = -1e30   # python float literal -> jaxpr literal, never a captured const


def _round_up(v, m):
    return (v + m - 1) // m * m


def gine_gi_kernel(x_ref, gsrc_ref, sdst_ref, elift_ref, pmask_ref,
                   w_emb_ref, b_emb_ref, w_nn_ref, b_nn_ref,
                   w_lin1_ref, b_lin1_ref, w_lin2_ref, b_lin2_ref,
                   out_ref, h_sc, agg_sc):
    f32 = jnp.float32
    layer = pl.program_id(0)
    tile = pl.program_id(1)
    n_layers = pl.num_programs(0)
    n_tiles = pl.num_programs(1)

    # ---- once, at the very first grid step: h = emb_in(x).relu() ----------
    @pl.when(jnp.logical_and(layer == 0, tile == 0))
    def _embed():
        x = jnp.dot(x_ref[...], w_emb_ref[...], preferred_element_type=f32)
        h_sc[...] = jnp.maximum(x + b_emb_ref[...], 0.0)

    # ---- per layer: clear the scatter-sum accumulator ----------------------
    @pl.when(tile == 0)
    def _zero_acc():
        agg_sc[...] = jnp.zeros_like(agg_sc)

    # ---- streamed edge tile: gather -> relu(x_j + e) -> scatter-add --------
    h = h_sc[...]                               # [N, H] f32 node state
    gsrc = gsrc_ref[...].astype(f32)            # [TE, N] one-hot(src), bf16 in HBM
    sdst = sdst_ref[0].astype(f32)              # [N, TE] one-hot(dst)^T, bf16 in HBM
    e = elift_ref[0]                            # [TE, H] precomputed Linear(1,H)(edge_attr)
    xj = jnp.dot(gsrc, h, preferred_element_type=f32)            # x[src] gather
    msg = jnp.maximum(xj + e, 0.0)                               # relu(x_j + e)
    agg_sc[...] += jnp.dot(sdst, msg, preferred_element_type=f32)  # aggr='add'

    # ---- end of a layer: GINE nn, relu, PairNorm ----------------------------
    @pl.when(tile == n_tiles - 1)
    def _finish_layer():
        hn = jnp.dot(h_sc[...] + agg_sc[...], w_nn_ref[0],
                     preferred_element_type=f32) + b_nn_ref[0]
        hn = jnp.maximum(hn, 0.0)
        hn = hn - jnp.mean(hn, axis=0, keepdims=True)
        sq = jnp.sum(hn * hn, axis=-1, keepdims=True)            # [N, 1]
        inv = jax.lax.rsqrt(PAIRNORM_EPS + jnp.mean(sq))         # scalar rsqrt on EUP
        h_sc[...] = hn * inv

    # ---- very last grid step: global max pool + MLP head --------------------
    @pl.when(jnp.logical_and(layer == n_layers - 1, tile == n_tiles - 1))
    def _head():
        hf = h_sc[...]                          # [N, H]
        mask = pmask_ref[...]                   # [N, B] one-hot(batch), lane-dense B
        # TODO(synk): for very large graph counts, replace this unrolled masked
        # max with scalar-prefetched per-graph node offsets + pl.ds row slices.
        pooled_rows = []
        for b in range(mask.shape[1]):
            mb = mask[:, b:b + 1]                                           # [N, 1]
            pooled_rows.append(jnp.max(jnp.where(mb > 0.5, hf, NEG_INF),
                                       axis=0, keepdims=True))              # [1, H]
        pooled = jnp.concatenate(pooled_rows, axis=0)                       # [B, H]
        z = jnp.dot(pooled, w_lin1_ref[...], preferred_element_type=f32) + b_lin1_ref[...]
        z = jnp.maximum(z, 0.0)                 # dropout(p=0.2) is identity in eval
        out_ref[...] = jnp.dot(z, w_lin2_ref[...],
                               preferred_element_type=f32) + b_lin2_ref[...]


def gine_gi_forward(x, edge_src, edge_dst, edge_attr, batch, num_graphs, params,
                    *, edge_tile=256):
    """Builds streamed bf16 gather/scatter operators and calls the Pallas kernel."""
    f32 = jnp.float32
    N, F_in = int(x.shape[0]), int(x.shape[1])
    E = int(edge_src.shape[0])
    H = int(params['w_emb'].shape[1])
    L = int(params['w_nn'].shape[0])
    B = int(num_graphs)

    # ---- edge-dimension tiling (sublane aligned; padded edges are no-ops) ----
    TE = _round_up(max(8, min(int(edge_tile), _round_up(E, 8))), 8)
    n_tiles = pl.cdiv(E, TE)
    E_pad = n_tiles * TE
    pad = E_pad - E
    src_p = jnp.concatenate([edge_src.astype(jnp.int32), jnp.full((pad,), N, jnp.int32)])
    dst_p = jnp.concatenate([edge_dst.astype(jnp.int32), jnp.full((pad,), N, jnp.int32)])
    ea_p = jnp.concatenate([edge_attr.astype(f32),
                            jnp.zeros((pad, edge_attr.shape[1]), f32)])

    # One-hot gather/scatter operators stored in bf16 (0/1 -> exact), upcast to
    # f32 in-kernel so all arithmetic stays f32.  Out-of-range index N gives an
    # all-zero row, so padded edges contribute nothing.
    gsrc = jax.nn.one_hot(src_p, N, dtype=jnp.bfloat16)                      # [E_pad, N]
    sdst = (jax.nn.one_hot(dst_p, N, dtype=jnp.bfloat16)
            .reshape(n_tiles, TE, N).transpose(0, 2, 1))                     # [T, N, TE]

    # Lane-dense precomputed edge lift (removes the 128x padded [E,1] input).
    elift = (jnp.einsum('ek,lkh->leh', ea_p, params['w_edge'])
             + params['b_edge']).astype(f32)                                 # [L, E_pad, H]

    # Pool membership, node-major so the kernel only needs 2-D ops.
    pmask = jax.nn.one_hot(batch, B, dtype=f32)                              # [N, B]

    grid = (L, n_tiles)
    in_specs = [
        pl.BlockSpec((N, F_in), lambda l, t: (0, 0)),        # x
        pl.BlockSpec((TE, N), lambda l, t: (t, 0)),          # gather one-hot tile
        pl.BlockSpec((1, N, TE), lambda l, t: (t, 0, 0)),    # scatter one-hot tile
        pl.BlockSpec((1, TE, H), lambda l, t: (l, t, 0)),    # edge-lift tile
        pl.BlockSpec((N, B), lambda l, t: (0, 0)),           # pool mask
        pl.BlockSpec((F_in, H), lambda l, t: (0, 0)),        # w_emb
        pl.BlockSpec((1, H), lambda l, t: (0, 0)),           # b_emb
        pl.BlockSpec((1, H, H), lambda l, t: (l, 0, 0)),     # w_nn (per layer)
        pl.BlockSpec((1, 1, H), lambda l, t: (l, 0, 0)),     # b_nn (per layer)
        pl.BlockSpec((H, H), lambda l, t: (0, 0)),           # w_lin1
        pl.BlockSpec((1, H), lambda l, t: (0, 0)),           # b_lin1
        pl.BlockSpec((H, 2), lambda l, t: (0, 0)),           # w_lin2
        pl.BlockSpec((1, 2), lambda l, t: (0, 0)),           # b_lin2
    ]
    out_spec = pl.BlockSpec((B, 2), lambda l, t: (0, 0))
    scratch = [pltpu.VMEM((N, H), f32),      # node state h (persists across grid)
               pltpu.VMEM((N, H), f32)]      # per-layer scatter-sum accumulator

    # ---- VMEM budget: double-buffered streamed tiles + resident state -------
    lanes = lambda v: _round_up(v, 128)
    subl = lambda v: _round_up(max(v, 1), 8)
    streamed = 2 * (subl(TE) * lanes(N) * 2          # gsrc tile (bf16)
                    + subl(N) * lanes(TE) * 2        # sdst tile (bf16)
                    + subl(TE) * lanes(H) * 4)       # edge-lift tile (f32)
    resident = (subl(N) * lanes(F_in) * 4 + subl(N) * lanes(B) * 4
                + 2 * subl(N) * lanes(H) * 4
                + (subl(F_in) + 4 * subl(H) + 4 + L * (subl(H) + 8)) * lanes(H) * 4)
    vmem_limit = int(min(64 * 1024 * 1024,
                         max(16 * 1024 * 1024, 2 * (streamed + resident))))

    cost = pl.CostEstimate(
        flops=int(2 * N * F_in * H
                  + L * (4 * E_pad * N * H + 2 * N * H * H)
                  + 2 * B * H * H + 2 * B * H * 2),
        transcendentals=int(L),
        bytes_accessed=int(L * (2 * E_pad * N * 2 + E_pad * H * 4)
                           + N * (F_in + H) * 4 + N * B * 4
                           + (F_in * H + L * (H * H + 2 * H) + H * H + 3 * H + 2) * 4
                           + B * 2 * 4),
    )

    return pl.pallas_call(
        gine_gi_kernel,
        out_shape=jax.ShapeDtypeStruct((B, 2), f32),
        grid_spec=pltpu.PrefetchScalarGridSpec(
            num_scalar_prefetch=0,
            grid=grid,
            in_specs=in_specs,
            out_specs=out_spec,
            scratch_shapes=scratch),
        compiler_params=pltpu.CompilerParams(
            dimension_semantics=("arbitrary", "arbitrary"),
            vmem_limit_bytes=vmem_limit),
        cost_estimate=cost,
    )(x, gsrc, sdst, elift, pmask,
      params['w_emb'], params['b_emb'],
      params['w_nn'], params['b_nn'],
      params['w_lin1'], params['b_lin1'],
      params['w_lin2'], params['b_lin2'])


def init_params(key, hidden=HIDDEN):
    """Deterministic torch.nn.Linear-style init (uniform +-1/sqrt(fan_in))."""
    def lin(k, fan_in, fan_out):
        bound = 1.0 / (fan_in ** 0.5)
        kw, kb = jax.random.split(k)
        w = jax.random.uniform(kw, (fan_in, fan_out), jnp.float32, -bound, bound)
        b = jax.random.uniform(kb, (1, fan_out), jnp.float32, -bound, bound)
        return w, b

    ks = jax.random.split(key, 9)
    w_emb, b_emb = lin(ks[0], 5, hidden)
    w_edge, b_edge, w_nn, b_nn = [], [], [], []
    for l in range(NUM_LAYERS):
        we, be = lin(ks[1 + 2 * l], 1, hidden)       # GINEConv edge Linear(1, H)
        wn, bn = lin(ks[2 + 2 * l], hidden, hidden)  # GINEConv nn = Linear(H, H)
        w_edge.append(we); b_edge.append(be)
        w_nn.append(wn); b_nn.append(bn)
    w_lin1, b_lin1 = lin(ks[7], hidden, hidden)
    w_lin2, b_lin2 = lin(ks[8], hidden, 2)
    return dict(
        w_emb=w_emb, b_emb=b_emb,
        w_edge=jnp.stack(w_edge), b_edge=jnp.stack(b_edge),   # [3,1,H]
        w_nn=jnp.stack(w_nn), b_nn=jnp.stack(b_nn),           # [3,H,H], [3,1,H]
        w_lin1=w_lin1, b_lin1=b_lin1,
        w_lin2=w_lin2, b_lin2=b_lin2,
    )


def reference_forward(h, edge_src, edge_dst, edge_attr, batch, num_graphs, params):
    """Pure-JAX reference using real gather / segment ops, for validation."""
    N = h.shape[0]
    h = jax.nn.relu(h @ params['w_emb'] + params['b_emb'])
    for l in range(NUM_LAYERS):
        e = edge_attr @ params['w_edge'][l] + params['b_edge'][l]
        m = jax.nn.relu(h[edge_src] + e)
        agg = jax.ops.segment_sum(m, edge_dst, num_segments=N)
        h = jax.nn.relu((h + agg) @ params['w_nn'][l] + params['b_nn'][l])
        h = h - h.mean(axis=0, keepdims=True)
        h = h / jnp.sqrt(PAIRNORM_EPS + jnp.mean(jnp.sum(h * h, axis=-1)))
    pooled = jax.ops.segment_max(h, batch, num_segments=num_graphs)
    z = jax.nn.relu(pooled @ params['w_lin1'] + params['b_lin1'])
    return z @ params['w_lin2'] + params['b_lin2']


if __name__ == "__main__":
    key = jax.random.PRNGKey(0)
    k_feat, k_edge, k_par = jax.random.split(key, 3)

    # two graphs of 8 nodes each, bidirectional ring edges within each graph
    nodes_per_graph = 8
    B = 2
    N = B * nodes_per_graph
    src_list, dst_list = [], []
    for g in range(B):
        base = g * nodes_per_graph
        for i in range(nodes_per_graph):
            j = (i + 1) % nodes_per_graph
            src_list += [base + i, base + j]
            dst_list += [base + j, base + i]
    edge_src = jnp.array(src_list, jnp.int32)
    edge_dst = jnp.array(dst_list, jnp.int32)
    E = edge_src.shape[0]

    h = jax.random.normal(k_feat, (N, 5), jnp.float32)                      # data.h
    edge_attr = jax.random.normal(k_edge, (E, 1), jnp.float32)              # data.edge_attr
    batch = jnp.repeat(jnp.arange(B, dtype=jnp.int32), nodes_per_graph)     # data.batch

    params = init_params(k_par)

    # edge_tile=16 -> 2 edge tiles per layer, grid=(3, 2): exercises streaming.
    out = gine_gi_forward(h, edge_src, edge_dst, edge_attr, batch, B, params,
                          edge_tile=16)
    out = jax.block_until_ready(out)

    ref = reference_forward(h, edge_src, edge_dst, edge_attr, batch, B, params)
    assert out.shape == (B, 2)
    # Tolerance covers TPU default (bf16-pass) matmul precision differences
    # between the one-hot-matmul kernel and the gather/segment reference;
    # in full-f32 execution the two agree to ~1e-6.
    assert jnp.allclose(out, ref, atol=1e-2, rtol=1e-2), (out, ref)
    print("KERNEL_OK")
</pallas_src>

<mosaic_0001>
module attributes {stable_mosaic.version = 11 : i64} {
  func.func @gine_gi_kernel(%arg0: i32, %arg1: i32, %arg2: memref<16x5xf32, #tpu.memory_space<vmem>>, %arg3: memref<16x16xbf16, #tpu.memory_space<vmem>>, %arg4: memref<1x16x16xbf16, #tpu.memory_space<vmem>>, %arg5: memref<1x16x32xf32, #tpu.memory_space<vmem>>, %arg6: memref<16x2xf32, #tpu.memory_space<vmem>>, %arg7: memref<5x32xf32, #tpu.memory_space<vmem>>, %arg8: memref<1x32xf32, #tpu.memory_space<vmem>>, %arg9: memref<1x32x32xf32, #tpu.memory_space<vmem>>, %arg10: memref<1x1x32xf32, #tpu.memory_space<vmem>>, %arg11: memref<32x32xf32, #tpu.memory_space<vmem>>, %arg12: memref<1x32xf32, #tpu.memory_space<vmem>>, %arg13: memref<32x2xf32, #tpu.memory_space<vmem>>, %arg14: memref<1x2xf32, #tpu.memory_space<vmem>>, %arg15: memref<2x2xf32, #tpu.memory_space<vmem>>, %arg16: memref<16x32xf32, #tpu.memory_space<vmem>>, %arg17: memref<16x32xf32, #tpu.memory_space<vmem>>) attributes {dimension_semantics = [#tpu.dimension_semantics<arbitrary>, #tpu.dimension_semantics<arbitrary>], iteration_bounds = array<i64: 3, 2>, scalar_prefetch = 0 : i64, scratch_operands = 2 : i64, tpu.core_type = #tpu.core_type<tc>, window_params = [{pipeline_mode = #tpu.pipeline_mode<synchronous>, transform_indices = @transform_0, window_bounds = array<i64: 16, 5>}, {transform_indices = @transform_1, window_bounds = array<i64: 16, 16>}, {transform_indices = @transform_2, window_bounds = array<i64: 1, 16, 16>}, {transform_indices = @transform_3, window_bounds = array<i64: 1, 16, 32>}, {pipeline_mode = #tpu.pipeline_mode<synchronous>, transform_indices = @transform_4, window_bounds = array<i64: 16, 2>}, {pipeline_mode = #tpu.pipeline_mode<synchronous>, transform_indices = @transform_5, window_bounds = array<i64: 5, 32>}, {pipeline_mode = #tpu.pipeline_mode<synchronous>, transform_indices = @transform_6, window_bounds = array<i64: 1, 32>}, {transform_indices = @transform_7, window_bounds = array<i64: 1, 32, 32>}, {transform_indices = @transform_8, window_bounds = array<i64: 1, 1, 32>}, {pipeline_mode = #tpu.pipeline_mode<synchronous>, transform_indices = @transform_9, window_bounds = array<i64: 32, 32>}, {pipeline_mode = #tpu.pipeline_mode<synchronous>, transform_indices = @transform_10, window_bounds = array<i64: 1, 32>}, {pipeline_mode = #tpu.pipeline_mode<synchronous>, transform_indices = @transform_11, window_bounds = array<i64: 32, 2>}, {pipeline_mode = #tpu.pipeline_mode<synchronous>, transform_indices = @transform_12, window_bounds = array<i64: 1, 2>}, {pipeline_mode = #tpu.pipeline_mode<synchronous>, transform_indices = @transform_13, window_bounds = array<i64: 2, 2>}]} {
    %c0_i32 = arith.constant 0 : i32
    %0 = arith.cmpi eq, %arg0, %c0_i32 : i32
    %c0_i32_0 = arith.constant 0 : i32
    %1 = arith.cmpi eq, %arg1, %c0_i32_0 : i32
    %2 = arith.andi %0, %1 : i1
    %3 = arith.extui %2 : i1 to i32
    %c0_i32_1 = arith.constant 0 : i32
    %4 = arith.cmpi ne, %3, %c0_i32_1 : i32
    scf.if %4 {
      %c0_22 = arith.constant 0 : index
      %c0_23 = arith.constant 0 : index
      %32 = vector.load %arg2[%c0_22, %c0_23] : memref<16x5xf32, #tpu.memory_space<vmem>>, vector<16x5xf32>
      %c0_24 = arith.constant 0 : index
      %c0_25 = arith.constant 0 : index
      %33 = vector.load %arg7[%c0_24, %c0_25] : memref<5x32xf32, #tpu.memory_space<vmem>>, vector<5x32xf32>
      %cst_26 = arith.constant dense<0.000000e+00> : vector<16x32xf32>
      %34 = tpu.matmul %32, %33, %cst_26 {dimension_numbers = #tpu.dot_dimension_numbers<[1], [0], [0], [1], [0, 0, 1, 1], [], []>} : vector<16x5xf32>, vector<5x32xf32>, vector<16x32xf32> -> vector<16x32xf32>
      %c0_27 = arith.constant 0 : index
      %c0_28 = arith.constant 0 : index
      %35 = vector.load %arg8[%c0_27, %c0_28] : memref<1x32xf32, #tpu.memory_space<vmem>>, vector<1x32xf32>
      %36 = vector.broadcast %35 : vector<1x32xf32> to vector<16x32xf32>
      %37 = arith.addf %34, %36 : vector<16x32xf32>
      %cst_29 = arith.constant 0.000000e+00 : f32
      %38 = vector.broadcast %cst_29 : f32 to vector<16x32xf32>
      %39 = arith.maximumf %37, %38 : vector<16x32xf32>
      %c0_30 = arith.constant 0 : index
      %c0_31 = arith.constant 0 : index
      %40 = vector.load %arg16[%c0_30, %c0_31] : memref<16x32xf32, #tpu.memory_space<vmem>>, vector<16x32xf32>
      tpu.vector_store %arg16[%c0_30, %c0_31], %39 {strides = array<i32>} : memref<16x32xf32, #tpu.memory_space<vmem>>, vector<16x32xf32>,
    } else {
    }
    %c0_i32_2 = arith.constant 0 : i32
    %5 = arith.cmpi eq, %arg1, %c0_i32_2 : i32
    %6 = arith.extui %5 : i1 to i32
    %c0_i32_3 = arith.constant 0 : i32
    %7 = arith.cmpi ne, %6, %c0_i32_3 : i32
    scf.if %7 {
      %cst_22 = arith.constant 0.000000e+00 : f32
      %32 = vector.broadcast %cst_22 : f32 to vector<16x32xf32>
      %c0_23 = arith.constant 0 : index
      %c0_24 = arith.constant 0 : index
      %33 = vector.load %arg17[%c0_23, %c0_24] : memref<16x32xf32, #tpu.memory_space<vmem>>, vector<16x32xf32>
      tpu.vector_store %arg17[%c0_23, %c0_24], %32 {strides = array<i32>} : memref<16x32xf32, #tpu.memory_space<vmem>>, vector<16x32xf32>,
    } else {
    }
    %c0 = arith.constant 0 : index
    %c0_4 = arith.constant 0 : index
    %8 = vector.load %arg16[%c0, %c0_4] : memref<16x32xf32, #tpu.memory_space<vmem>>, vector<16x32xf32>
    %c0_5 = arith.constant 0 : index
    %c0_6 = arith.constant 0 : index
    %9 = vector.load %arg3[%c0_5, %c0_6] : memref<16x16xbf16, #tpu.memory_space<vmem>>, vector<16x16xbf16>
    %10 = arith.extf %9 : vector<16x16xbf16> to vector<16x16xf32>
    %c0_7 = arith.constant 0 : index
    %c0_8 = arith.constant 0 : index
    %c0_9 = arith.constant 0 : index
    %11 = vector.load %arg4[%c0_7, %c0_8, %c0_9] : memref<1x16x16xbf16, #tpu.memory_space<vmem>>, vector<1x16x16xbf16>
    %12 = vector.shape_cast %11 : vector<1x16x16xbf16> to vector<16x16xbf16>
    %13 = arith.extf %12 : vector<16x16xbf16> to vector<16x16xf32>
    %c0_10 = arith.constant 0 : index
    %c0_11 = arith.constant 0 : index
    %c0_12 = arith.constant 0 : index
    %14 = vector.load %arg5[%c0_10, %c0_11, %c0_12] : memref<1x16x32xf32, #tpu.memory_space<vmem>>, vector<1x16x32xf32>
    %15 = vector.shape_cast %14 : vector<1x16x32xf32> to vector<16x32xf32>
    %cst = arith.constant dense<0.000000e+00> : vector<16x32xf32>
    %16 = tpu.matmul %10, %8, %cst {dimension_numbers = #tpu.dot_dimension_numbers<[1], [0], [0], [1], [0, 0, 1, 1], [], []>} : vector<16x16xf32>, vector<16x32xf32>, vector<16x32xf32> -> vector<16x32xf32>
    %17 = arith.addf %16, %15 : vector<16x32xf32>
    %cst_13 = arith.constant 0.000000e+00 : f32
    %18 = vector.broadcast %cst_13 : f32 to vector<16x32xf32>
    %19 = arith.maximumf %17, %18 : vector<16x32xf32>
    %c0_14 = arith.constant 0 : index
    %c0_15 = arith.constant 0 : index
    %20 = vector.load %arg17[%c0_14, %c0_15] : memref<16x32xf32, #tpu.memory_space<vmem>>, vector<16x32xf32>
    %cst_16 = arith.constant dense<0.000000e+00> : vector<16x32xf32>
    %21 = tpu.matmul %13, %19, %cst_16 {dimension_numbers = #tpu.dot_dimension_numbers<[1], [0], [0], [1], [0, 0, 1, 1], [], []>} : vector<16x16xf32>, vector<16x32xf32>, vector<16x32xf32> -> vector<16x32xf32>
    %22 = arith.addf %20, %21 : vector<16x32xf32>
    %c0_17 = arith.constant 0 : index
    %c0_18 = arith.constant 0 : index
    %23 = vector.load %arg17[%c0_17, %c0_18] : memref<16x32xf32, #tpu.memory_space<vmem>>, vector<16x32xf32>
    tpu.vector_store %arg17[%c0_17, %c0_18], %22 {strides = array<i32>} : memref<16x32xf32, #tpu.memory_space<vmem>>, vector<16x32xf32>,
    %c1_i32 = arith.constant 1 : i32
    %24 = arith.cmpi eq, %arg1, %c1_i32 : i32
    %25 = arith.extui %24 : i1 to i32
    %c0_i32_19 = arith.constant 0 : i32
    %26 = arith.cmpi ne, %25, %c0_i32_19 : i32
    scf.if %26 {
      %c0_22 = arith.constant 0 : index
      %c0_23 = arith.constant 0 : index
      %32 = vector.load %arg16[%c0_22, %c0_23] : memref<16x32xf32, #tpu.memory_space<vmem>>, vector<16x32xf32>
      %c0_24 = arith.constant 0 : index
      %c0_25 = arith.constant 0 : index
      %33 = vector.load %arg17[%c0_24, %c0_25] : memref<16x32xf32, #tpu.memory_space<vmem>>, vector<16x32xf32>
      %34 = arith.addf %32, %33 : vector<16x32xf32>
      %c0_26 = arith.constant 0 : index
      %c0_27 = arith.constant 0 : index
      %c0_28 = arith.constant 0 : index
      %35 = vector.load %arg9[%c0_26, %c0_27, %c0_28] : memref<1x32x32xf32, #tpu.memory_space<vmem>>, vector<1x32x32xf32>
      %36 = vector.shape_cast %35 : vector<1x32x32xf32> to vector<32x32xf32>
      %cst_29 = arith.constant dense<0.000000e+00> : vector<16x32xf32>
      %37 = tpu.matmul %34, %36, %cst_29 {dimension_numbers = #tpu.dot_dimension_numbers<[1], [0], [0], [1], [0, 0, 1, 1], [], []>} : vector<16x32xf32>, vector<32x32xf32>, vector<16x32xf32> -> vector<16x32xf32>
      %c0_30 = arith.constant 0 : index
      %c0_31 = arith.constant 0 : index
      %c0_32 = arith.constant 0 : index
      %38 = vector.load %arg10[%c0_30, %c0_31, %c0_32] : memref<1x1x32xf32, #tpu.memory_space<vmem>>, vector<1x1x32xf32>
      %39 = vector.shape_cast %38 : vector<1x1x32xf32> to vector<1x32xf32>
      %40 = vector.broadcast %39 : vector<1x32xf32> to vector<16x32xf32>
      %41 = arith.addf %37, %40 : vector<16x32xf32>
      %cst_33 = arith.constant 0.000000e+00 : f32
      %42 = vector.broadcast %cst_33 : f32 to vector<16x32xf32>
      %43 = arith.maximumf %41, %42 : vector<16x32xf32>
      %cst_34 = arith.constant dense<0.000000e+00> : vector<32xf32>
      %44 = vector.multi_reduction <add>, %43, %cst_34 [0] : vector<16x32xf32> to vector<32xf32>
      %45 = vector.shape_cast %44 : vector<32xf32> to vector<1x32xf32>
      %cst_35 = arith.constant 1.600000e+01 : f32
      %46 = vector.broadcast %cst_35 : f32 to vector<1x32xf32>
      %47 = arith.divf %45, %46 : vector<1x32xf32>
      %48 = vector.broadcast %47 : vector<1x32xf32> to vector<16x32xf32>
      %49 = arith.subf %43, %48 : vector<16x32xf32>
      %50 = arith.mulf %49, %49 : vector<16x32xf32>
      %cst_36 = arith.constant dense<0.000000e+00> : vector<16xf32>
      %51 = vector.multi_reduction <add>, %50, %cst_36 [1] : vector<16x32xf32> to vector<16xf32>
      %52 = vector.shape_cast %51 : vector<16xf32> to vector<16x1xf32>
      %53 = vector.shape_cast %52 : vector<16x1xf32> to vector<1x16x1xf32>
      %cst_37 = arith.constant dense<0.000000e+00> : vector<1xf32>
      %54 = vector.multi_reduction <add>, %53, %cst_37 [1, 2] : vector<1x16x1xf32> to vector<1xf32>
      %55 = vector.shape_cast %54 : vector<1xf32> to vector<1x1x1xf32>
      %56 = vector.extract %55[0, 0, 0] : f32 from vector<1x1x1xf32>
      %cst_38 = arith.constant 1.600000e+01 : f32
      %57 = arith.divf %56, %cst_38 : f32
      %cst_39 = arith.constant 9.99999974E-6 : f32
      %58 = arith.addf %cst_39, %57 : f32
      %59 = math.rsqrt %58 : f32
      %60 = vector.broadcast %59 : f32 to vector<16x32xf32>
      %61 = arith.mulf %49, %60 : vector<16x32xf32>
      %c0_40 = arith.constant 0 : index
      %c0_41 = arith.constant 0 : index
      %62 = vector.load %arg16[%c0_40, %c0_41] : memref<16x32xf32, #tpu.memory_space<vmem>>, vector<16x32xf32>
      tpu.vector_store %arg16[%c0_40, %c0_41], %61 {strides = array<i32>} : memref<16x32xf32, #tpu.memory_space<vmem>>, vector<16x32xf32>,
    } else {
    }
    %c2_i32 = arith.constant 2 : i32
    %27 = arith.cmpi eq, %arg0, %c2_i32 : i32
    %c1_i32_20 = arith.constant 1 : i32
    %28 = arith.cmpi eq, %arg1, %c1_i32_20 : i32
    %29 = arith.andi %27, %28 : i1
    %30 = arith.extui %29 : i1 to i32
    %c0_i32_21 = arith.constant 0 : i32
    %31 = arith.cmpi ne, %30, %c0_i32_21 : i32
    scf.if %31 {
      %c0_22 = arith.constant 0 : index
      %c0_23 = arith.constant 0 : index
      %32 = vector.load %arg16[%c0_22, %c0_23] : memref<16x32xf32, #tpu.memory_space<vmem>>, vector<16x32xf32>
      %c0_24 = arith.constant 0 : index
      %c0_25 = arith.constant 0 : index
      %33 = vector.load %arg6[%c0_24, %c0_25] : memref<16x2xf32, #tpu.memory_space<vmem>>, vector<16x2xf32>
      %34 = vector.extract_strided_slice %33 {offsets = [0, 0], sizes = [16, 1], strides = [1, 1]} : vector<16x2xf32> to vector<16x1xf32>
      %cst_26 = arith.constant 5.000000e-01 : f32
      %35 = vector.broadcast %cst_26 : f32 to vector<16x1xf32>
      %36 = arith.cmpf ogt, %34, %35 : vector<16x1xf32>
      %cst_27 = arith.constant -1.000000e+30 : f32
      %37 = vector.shape_cast %36 : vector<16x1xi1> to vector<16x1xi1>
      %38 = vector.broadcast %37 : vector<16x1xi1> to vector<16x32xi1>
      %39 = vector.broadcast %cst_27 : f32 to vector<16x32xf32>
      %40 = arith.select %38, %32, %39 : vector<16x32xi1>, vector<16x32xf32>
      %cst_28 = arith.constant dense<0xFF800000> : vector<32xf32>
      %41 = vector.multi_reduction <maximumf>, %40, %cst_28 [0] : vector<16x32xf32> to vector<32xf32>
      %42 = vector.shape_cast %41 : vector<32xf32> to vector<1x32xf32>
      %43 = vector.extract_strided_slice %33 {offsets = [0, 1], sizes = [16, 1], strides = [1, 1]} : vector<16x2xf32> to vector<16x1xf32>
      %cst_29 = arith.constant 5.000000e-01 : f32
      %44 = vector.broadcast %cst_29 : f32 to vector<16x1xf32>
      %45 = arith.cmpf ogt, %43, %44 : vector<16x1xf32>
      %cst_30 = arith.constant -1.000000e+30 : f32
      %46 = vector.shape_cast %45 : vector<16x1xi1> to vector<16x1xi1>
      %47 = vector.broadcast %46 : vector<16x1xi1> to vector<16x32xi1>
      %48 = vector.broadcast %cst_30 : f32 to vector<16x32xf32>
      %49 = arith.select %47, %32, %48 : vector<16x32xi1>, vector<16x32xf32>
      %cst_31 = arith.constant dense<0xFF800000> : vector<32xf32>
      %50 = vector.multi_reduction <maximumf>, %49, %cst_31 [0] : vector<16x32xf32> to vector<32xf32>
      %51 = vector.shape_cast %50 : vector<32xf32> to vector<1x32xf32>
      %52 = tpu.concatenate %42, %51 in 0 : vector<1x32xf32>, vector<1x32xf32> -> vector<2x32xf32>
      %c0_32 = arith.constant 0 : index
      %c0_33 = arith.constant 0 : index
      %53 = vector.load %arg11[%c0_32, %c0_33] : memref<32x32xf32, #tpu.memory_space<vmem>>, vector<32x32xf32>
      %cst_34 = arith.constant dense<0.000000e+00> : vector<2x32xf32>
      %54 = tpu.matmul %52, %53, %cst_34 {dimension_numbers = #tpu.dot_dimension_numbers<[1], [0], [0], [1], [0, 0, 1, 1], [], []>} : vector<2x32xf32>, vector<32x32xf32>, vector<2x32xf32> -> vector<2x32xf32>
      %c0_35 = arith.constant 0 : index
      %c0_36 = arith.constant 0 : index
      %55 = vector.load %arg12[%c0_35, %c0_36] : memref<1x32xf32, #tpu.memory_space<vmem>>, vector<1x32xf32>
      %56 = vector.broadcast %55 : vector<1x32xf32> to vector<2x32xf32>
      %57 = arith.addf %54, %56 : vector<2x32xf32>
      %cst_37 = arith.constant 0.000000e+00 : f32
      %58 = vector.broadcast %cst_37 : f32 to vector<2x32xf32>
      %59 = arith.maximumf %57, %58 : vector<2x32xf32>
      %c0_38 = arith.constant 0 : index
      %c0_39 = arith.constant 0 : index
      %60 = vector.load %arg13[%c0_38, %c0_39] : memref<32x2xf32, #tpu.memory_space<vmem>>, vector<32x2xf32>
      %cst_40 = arith.constant dense<0.000000e+00> : vector<2x2xf32>
      %61 = tpu.matmul %59, %60, %cst_40 {dimension_numbers = #tpu.dot_dimension_numbers<[1], [0], [0], [1], [0, 0, 1, 1], [], []>} : vector<2x32xf32>, vector<32x2xf32>, vector<2x2xf32> -> vector<2x2xf32>
      %c0_41 = arith.constant 0 : index
      %c0_42 = arith.constant 0 : index
      %62 = vector.load %arg14[%c0_41, %c0_42] : memref<1x2xf32, #tpu.memory_space<vmem>>, vector<1x2xf32>
      %63 = vector.broadcast %62 : vector<1x2xf32> to vector<2x2xf32>
      %64 = arith.addf %61, %63 : vector<2x2xf32>
      %c0_43 = arith.constant 0 : index
      %c0_44 = arith.constant 0 : index
      %65 = vector.load %arg15[%c0_43, %c0_44] : memref<2x2xf32, #tpu.memory_space<vmem>>, vector<2x2xf32>
      tpu.vector_store %arg15[%c0_43, %c0_44], %64 {strides = array<i32>} : memref<2x2xf32, #tpu.memory_space<vmem>>, vector<2x2xf32>,
    } else {
    }
    return
  }
  func.func @transform_0(%arg0: i32, %arg1: i32) -> (i32, i32) {
    %c0_i32 = arith.constant 0 : i32
    %c0_i32_0 = arith.constant 0 : i32
    %c0_i32_1 = arith.constant 0 : i32
    return %c0_i32, %c0_i32_0 : i32, i32
  }
  func.func @transform_1(%arg0: i32, %arg1: i32) -> (i32, i32) {
    %c0_i32 = arith.constant 0 : i32
    %c0_i32_0 = arith.constant 0 : i32
    return %arg1, %c0_i32 : i32, i32
  }
  func.func @transform_2(%arg0: i32, %arg1: i32) -> (i32, i32, i32) {
    %c0_i32 = arith.constant 0 : i32
    %c0_i32_0 = arith.constant 0 : i32
    %c0_i32_1 = arith.constant 0 : i32
    return %arg1, %c0_i32, %c0_i32_0 : i32, i32, i32
  }
  func.func @transform_3(%arg0: i32, %arg1: i32) -> (i32, i32, i32) {
    %c0_i32 = arith.constant 0 : i32
    %c0_i32_0 = arith.constant 0 : i32
    return %arg0, %arg1, %c0_i32 : i32, i32, i32
  }
  func.func @transform_4(%arg0: i32, %arg1: i32) -> (i32, i32) {
    %c0_i32 = arith.constant 0 : i32
    %c0_i32_0 = arith.constant 0 : i32
    %c0_i32_1 = arith.constant 0 : i32
    return %c0_i32, %c0_i32_0 : i32, i32
  }
  func.func @transform_5(%arg0: i32, %arg1: i32) -> (i32, i32) {
    %c0_i32 = arith.constant 0 : i32
    %c0_i32_0 = arith.constant 0 : i32
    %c0_i32_1 = arith.constant 0 : i32
    return %c0_i32, %c0_i32_0 : i32, i32
  }
  func.func @transform_6(%arg0: i32, %arg1: i32) -> (i32, i32) {
    %c0_i32 = arith.constant 0 : i32
    %c0_i32_0 = arith.constant 0 : i32
    %c0_i32_1 = arith.constant 0 : i32
    return %c0_i32, %c0_i32_0 : i32, i32
  }
  func.func @transform_7(%arg0: i32, %arg1: i32) -> (i32, i32, i32) {
    %c0_i32 = arith.constant 0 : i32
    %c0_i32_0 = arith.constant 0 : i32
    %c0_i32_1 = arith.constant 0 : i32
    return %arg0, %c0_i32, %c0_i32_0 : i32, i32, i32
  }
  func.func @transform_8(%arg0: i32, %arg1: i32) -> (i32, i32, i32) {
    %c0_i32 = arith.constant 0 : i32
    %c0_i32_0 = arith.constant 0 : i32
    %c0_i32_1 = arith.constant 0 : i32
    return %arg0, %c0_i32, %c0_i32_0 : i32, i32, i32
  }
  func.func @transform_9(%arg0: i32, %arg1: i32) -> (i32, i32) {
    %c0_i32 = arith.constant 0 : i32
    %c0_i32_0 = arith.constant 0 : i32
    %c0_i32_1 = arith.constant 0 : i32
    return %c0_i32, %c0_i32_0 : i32, i32
  }
  func.func @transform_10(%arg0: i32, %arg1: i32) -> (i32, i32) {
    %c0_i32 = arith.constant 0 : i32
    %c0_i32_0 = arith.constant 0 : i32
    %c0_i32_1 = arith.constant 0 : i32
    return %c0_i32, %c0_i32_0 : i32, i32
  }
  func.func @transform_11(%arg0: i32, %arg1: i32) -> (i32, i32) {
    %c0_i32 = arith.constant 0 : i32
    %c0_i32_0 = arith.constant 0 : i32
    %c0_i32_1 = arith.constant 0 : i32
    return %c0_i32, %c0_i32_0 : i32, i32
  }
  func.func @transform_12(%arg0: i32, %arg1: i32) -> (i32, i32) {
    %c0_i32 = arith.constant 0 : i32
    %c0_i32_0 = arith.constant 0 : i32
    %c0_i32_1 = arith.constant 0 : i32
    return %c0_i32, %c0_i32_0 : i32, i32
  }
  func.func @transform_13(%arg0: i32, %arg1: i32) -> (i32, i32) {
    %c0_i32 = arith.constant 0 : i32
    %c0_i32_0 = arith.constant 0 : i32
    %c0_i32_1 = arith.constant 0 : i32
    return %c0_i32, %c0_i32_0 : i32, i32
  }
}

</mosaic_0001>

<llo_original>
// kernel: tpu_custom_call.1
$region0: #{tpu_custom_call.1}
  #allocation0 [shape = 'u32[]', space=smem, size = 0x4, offset = 0x4, fixed_abs, tag = 'smem constant byte address 0x4 - core index']
  #allocation1 [shape = 'u32[144,128]{1,0:T(1,128)}', space=vmem, size = 0x12000, scoped, tag = 'internal scratch']
  #allocation2 [shape = 'f32[16,32]{1,0:T(8,128)}', space=vmem, size = 0x2000, scoped, tag = 'scratch operand']
  #allocation3 [shape = 'f32[16,32]{1,0:T(8,128)}', space=vmem, size = 0x2000, scoped, tag = 'scratch operand']
  %s0 = inlined_call_operand.vmem [shape: f32[16,5], index: 0, kind: input, shape index: {}]
  %s1 = inlined_call_operand.vmem [shape: bf16[32,16], index: 1, kind: input, shape index: {}]
  %s2 = inlined_call_operand.hbm [shape: bf16[2,16,16], index: 2, kind: input, shape index: {}]
  %s3 = inlined_call_operand.vmem [shape: f32[3,32,32], index: 3, kind: input, shape index: {}]
  %s4 = inlined_call_operand.vmem [shape: f32[16,2], index: 4, kind: input, shape index: {}]
  %s5 = inlined_call_operand.hbm [shape: f32[5,32], index: 5, kind: input, shape index: {}]
  %s6 = inlined_call_operand.hbm [shape: f32[1,32], index: 6, kind: input, shape index: {}]
  %s7 = inlined_call_operand.hbm [shape: f32[3,32,32], index: 7, kind: input, shape index: {}]
  %s8 = inlined_call_operand.hbm [shape: f32[3,1,32], index: 8, kind: input, shape index: {}]
  %s9 = inlined_call_operand.vmem [shape: f32[32,32], index: 9, kind: input, shape index: {}]
  %s10 = inlined_call_operand.vmem [shape: f32[1,32], index: 10, kind: input, shape index: {}]
  %s11 = inlined_call_operand.vmem [shape: f32[32,2], index: 11, kind: input, shape index: {}]
  %s12 = inlined_call_operand.vmem [shape: f32[1,2], index: 12, kind: input, shape index: {}]
  %s13 = inlined_call_operand.hbm [shape: f32[2,2], index: 13, kind: output, shape index: {}]
  %s14 = sld [smem:[#allocation0]]
  $region121: #{tpu_custom_call.1} parent=0
    _
  %s16 = ssub.s32 1, %s14
  %s17 = scalar_select 0, %s16, %s14
  $region1: #{tpu_custom_call.1} parent=0
    #allocation4 [shape = 'u8[8192]{0}', space=vmem, size = 0x2000, scoped, tag = 'input window, operand 2']
    #allocation5 [shape = 's32[2]{0}', space=sflag, size = 0x8, scoped, tag = 'scoped memory for tpu_custom_call.1']
    #allocation6 [shape = 's32[2]{0}', space=sflag, size = 0x8, scoped, tag = 'scoped memory for tpu_custom_call.1']
    #allocation7 [shape = 'u8[4096]{0}', space=vmem, size = 0x1000, scoped, tag = 'input window, operand 5, single buffered']
    #allocation8 [shape = 's32[1]{0}', space=sflag, size = 0x4, scoped, tag = 'scoped memory for tpu_custom_call.1']
    #allocation9 [shape = 'u8[512]{0}', space=vmem, size = 0x400, scoped, tag = 'input window, operand 6, single buffered']
    #allocation10 [shape = 'u8[32768]{0}', space=vmem, size = 0x8000, scoped, tag = 'input window, operand 7']
    #allocation11 [shape = 's32[2]{0}', space=sflag, size = 0x8, scoped, tag = 'scoped memory for tpu_custom_call.1']
    #allocation12 [shape = 'u8[1024]{0}', space=vmem, size = 0x400, scoped, tag = 'input window, operand 8']
    #allocation13 [shape = 'u8[1024]{0}', space=vmem, size = 0x400, scoped, tag = 'output window, operand 0, single buffered']
    %18 = vsyncpa [#allocation5], 0
    %s19 = scalar_lea.sflag [#allocation5], 1
    %20 = vsyncpa %s19, 0
    %21 = vsyncpa [#allocation8], 0
    %22 = vsyncpa [#allocation11], 0
    %s23 = scalar_lea.sflag [#allocation11], 1
    %24 = vsyncpa %s23, 0
    %25 = vsyncpa [#allocation6], 0
    loop: start=0, step=1, limit=8
    $region2: #{tpu_custom_call.1} parent=1 // loop_pre_header
      _
    $region3: #{tpu_custom_call.1} parent=1 // loop_header
      %s27 = sphi 0, %s31
      %p28 = scmp.ge.s32.totalorder %s27, 8
      %s34 = sphi 0, %s46
      %s35 = sphi 0, %s42
      %s36 = sphi 0, %s34
      %s37 = sphi 0, %s35
      %s38 = sphi 0, %s36
      %s39 = sphi 0, %s37
      %s47 = sphi 0, %s47
      %s49 = sphi 0, %s47
      %s50 = sphi 0, %s49
      %s64 = sphi 0, %s50
      %s70 = sphi 0, %s72
      %s73 = sphi 0, %s70
      %s74 = sphi 0, %s73
      %s90 = sphi 0, %s74
      %s96 = sphi 0, %s98
      %s99 = sphi 0, %s96
      %s100 = sphi 0, %s99
      %s116 = sphi 0, %s100
      %s124 = sphi 0, %s126
      %s127 = sphi 0, %s124
      %s128 = sphi 0, %s127
      %s144 = sphi 0, %s128
      %s148 = sphi 0, %s148
      %s150 = sphi 0, %s148
      %s151 = sphi 0, %s150
      %s165 = sphi 0, %s151
      %s169 = sphi 0, %s169
      %s171 = sphi 0, %s169
      %s172 = sphi 0, %s171
      %s186 = sphi 0, %s172
      %s190 = sphi 0, %s190
      %s192 = sphi 0, %s190
      %s193 = sphi 0, %s192
      %s207 = sphi 0, %s193
      %s213 = sphi 0, %s215
      %s216 = sphi 0, %s213
      %s217 = sphi 0, %s216
      %s233 = sphi 0, %s217
      %s239 = sphi 0, %s241
      %s242 = sphi 0, %s239
      %s243 = sphi 0, %s242
      %s259 = sphi 0, %s243
      %s263 = sphi 0, %s263
      %s265 = sphi 0, %s263
      %s266 = sphi 0, %s265
      %s280 = sphi 0, %s266
      %s284 = sphi 0, %s284
      %s286 = sphi 0, %s284
      %s287 = sphi 0, %s286
      %s301 = sphi 0, %s287
      %s305 = sphi 0, %s305
      %s307 = sphi 0, %s305
      %s308 = sphi 0, %s307
      %s322 = sphi 0, %s308
      %s326 = sphi 0, %s326
      %s328 = sphi 0, %s326
      %s329 = sphi 0, %s328
      %s343 = sphi 0, %s329
      %s347 = sphi 0, %s347
      %s349 = sphi 0, %s347
      %s350 = sphi 0, %s349
      %s364 = sphi 0, %s350
    $region4: #{tpu_custom_call.1} parent=1 // loop_header_branch
      %30 = sbr.rel (%p28) target = $region8
    $region5: #{tpu_custom_call.1} parent=1 // loop_body
      %s32 = ssub.s32 %s27, 1
      %s33 = ssub.s32 %s27, 2
      %s40 = sadd.s32 1, %s35
      %p41 = scmp.ge.s32.totalorder %s40, 2
      %s42 = scalar_select %p41, 0, %s40
      %s43 = sadd.s32 1, %s34
      %s44 = scalar_select %p41, %s43, %s34
      %p45 = scmp.ge.s32.totalorder %s44, 3
      %s46 = scalar_select %p45, 0, %s44
      %s48 = sadd.s32 %s47, 1
      %p51 = scmp.eq.s32.totalorder %s27, 5
      %p52 = scmp.ne.s32.totalorder %s47, %s49
      %p53 = scmp.eq.s32.totalorder %s27, 0
      %p54 = por %p52, %p53
      %p55 = scmp.ne.s32.totalorder %s47, %s49
      %p56 = scmp.eq.s32.totalorder %s32, 5
      %p57 = por %p55, %p56
      %p58 = scmp.ne.s32.totalorder %s49, %s50
      %p59 = scmp.eq.s32.totalorder %s32, 0
      %p60 = por %p58, %p59
      %p61 = scmp.ne.s32.totalorder %s49, %s50
      %p62 = scmp.eq.s32.totalorder %s33, 5
      %p63 = por %p61, %p62
      %p65 = scmp.ne.s32.totalorder %s50, %s64
      %p66 = scmp.eq.s32.totalorder %s33, 0
      %p67 = por %p65, %p66
      %s68 = ssub.s32 %s35, %s42
      %p69 = scmp.eq.s32.totalorder %s68, 0
      %s71 = sadd.s32 %s70, 1
      %s72 = scalar_select %p69, %s70, %s71
      %p75 = pneg %p69
      %p76 = scmp.eq.s32.totalorder %s27, 5
      %p77 = por %p75, %p76
      %p78 = scmp.ne.s32.totalorder %s70, %s73
      %p79 = scmp.eq.s32.totalorder %s27, 0
      %p80 = por %p78, %p79
      %p81 = scmp.ne.s32.totalorder %s70, %s73
      %p82 = scmp.eq.s32.totalorder %s32, 5
      %p83 = por %p81, %p82
      %p84 = scmp.ne.s32.totalorder %s73, %s74
      %p85 = scmp.eq.s32.totalorder %s32, 0
      %p86 = por %p84, %p85
      %p87 = scmp.ne.s32.totalorder %s73, %s74
      %p88 = scmp.eq.s32.totalorder %s33, 5
      %p89 = por %p87, %p88
      %p91 = scmp.ne.s32.totalorder %s74, %s90
      %p92 = scmp.eq.s32.totalorder %s33, 0
      %p93 = por %p91, %p92
      %s94 = ssub.s32 %s35, %s42
      %p95 = scmp.eq.s32.totalorder %s94, 0
      %s97 = sadd.s32 %s96, 1
      %s98 = scalar_select %p95, %s96, %s97
      %p101 = pneg %p95
      %p102 = scmp.eq.s32.totalorder %s27, 5
      %p103 = por %p101, %p102
      %p104 = scmp.ne.s32.totalorder %s96, %s99
      %p105 = scmp.eq.s32.totalorder %s27, 0
      %p106 = por %p104, %p105
      %p107 = scmp.ne.s32.totalorder %s96, %s99
      %p108 = scmp.eq.s32.totalorder %s32, 5
      %p109 = por %p107, %p108
      %p110 = scmp.ne.s32.totalorder %s99, %s100
      %p111 = scmp.eq.s32.totalorder %s32, 0
      %p112 = por %p110, %p111
      %p113 = scmp.ne.s32.totalorder %s99, %s100
      %p114 = scmp.eq.s32.totalorder %s33, 5
      %p115 = por %p113, %p114
      %p117 = scmp.ne.s32.totalorder %s100, %s116
      %p118 = scmp.eq.s32.totalorder %s33, 0
      %p119 = por %p117, %p118
      %s120 = ssub.s32 %s34, %s46
      %s121 = ssub.s32 %s35, %s42
      %s122 = sor.u32 %s120, %s121
      %p123 = scmp.eq.s32.totalorder %s122, 0
      %s125 = sadd.s32 %s124, 1
      %s126 = scalar_select %p123, %s124, %s125
      %p129 = pneg %p123
      %p130 = scmp.eq.s32.totalorder %s27, 5
      %p131 = por %p129, %p130
      %p132 = scmp.ne.s32.totalorder %s124, %s127
      %p133 = scmp.eq.s32.totalorder %s27, 0
      %p134 = por %p132, %p133
      %p135 = scmp.ne.s32.totalorder %s124, %s127
      %p136 = scmp.eq.s32.totalorder %s32, 5
      %p137 = por %p135, %p136
      %p138 = scmp.ne.s32.totalorder %s127, %s128
      %p139 = scmp.eq.s32.totalorder %s32, 0
      %p140 = por %p138, %p139
      %p141 = scmp.ne.s32.totalorder %s127, %s128
      %p142 = scmp.eq.s32.totalorder %s33, 5
      %p143 = por %p141, %p142
      %p145 = scmp.ne.s32.totalorder %s128, %s144
      %p146 = scmp.eq.s32.totalorder %s33, 0
      %p147 = por %p145, %p146
      %s149 = sadd.s32 %s148, 1
      %p152 = scmp.eq.s32.totalorder %s27, 5
      %p153 = scmp.ne.s32.totalorder %s148, %s150
      %p154 = scmp.eq.s32.totalorder %s27, 0
      %p155 = por %p153, %p154
      %p156 = scmp.ne.s32.totalorder %s148, %s150
      %p157 = scmp.eq.s32.totalorder %s32, 5
      %p158 = por %p156, %p157
      %p159 = scmp.ne.s32.totalorder %s150, %s151
      %p160 = scmp.eq.s32.totalorder %s32, 0
      %p161 = por %p159, %p160
      %p162 = scmp.ne.s32.totalorder %s150, %s151
      %p163 = scmp.eq.s32.totalorder %s33, 5
      %p164 = por %p162, %p163
      %p166 = scmp.ne.s32.totalorder %s151, %s165
      %p167 = scmp.eq.s32.totalorder %s33, 0
      %p168 = por %p166, %p167
      %s170 = sadd.s32 %s169, 1
      %p173 = scmp.eq.s32.totalorder %s27, 5
      %p174 = scmp.ne.s32.totalorder %s169, %s171
      %p175 = scmp.eq.s32.totalorder %s27, 0
      %p176 = por %p174, %p175
      %p177 = scmp.ne.s32.totalorder %s169, %s171
      %p178 = scmp.eq.s32.totalorder %s32, 5
      %p179 = por %p177, %p178
      %p180 = scmp.ne.s32.totalorder %s171, %s172
      %p181 = scmp.eq.s32.totalorder %s32, 0
      %p182 = por %p180, %p181
      %p183 = scmp.ne.s32.totalorder %s171, %s172
      %p184 = scmp.eq.s32.totalorder %s33, 5
      %p185 = por %p183, %p184
      %p187 = scmp.ne.s32.totalorder %s172, %s186
      %p188 = scmp.eq.s32.totalorder %s33, 0
      %p189 = por %p187, %p188
      %s191 = sadd.s32 %s190, 1
      %p194 = scmp.eq.s32.totalorder %s27, 5
      %p195 = scmp.ne.s32.totalorder %s190, %s192
      %p196 = scmp.eq.s32.totalorder %s27, 0
      %p197 = por %p195, %p196
      %p198 = scmp.ne.s32.totalorder %s190, %s192
      %p199 = scmp.eq.s32.totalorder %s32, 5
      %p200 = por %p198, %p199
      %p201 = scmp.ne.s32.totalorder %s192, %s193
      %p202 = scmp.eq.s32.totalorder %s32, 0
      %p203 = por %p201, %p202
      %p204 = scmp.ne.s32.totalorder %s192, %s193
      %p205 = scmp.eq.s32.totalorder %s33, 5
      %p206 = por %p204, %p205
      %p208 = scmp.ne.s32.totalorder %s193, %s207
      %p209 = scmp.eq.s32.totalorder %s33, 0
      %p210 = por %p208, %p209
      %s211 = ssub.s32 %s34, %s46
      %p212 = scmp.eq.s32.totalorder %s211, 0
      %s214 = sadd.s32 %s213, 1
      %s215 = scalar_select %p212, %s213, %s214
      %p218 = pneg %p212
      %p219 = scmp.eq.s32.totalorder %s27, 5
      %p220 = por %p218, %p219
      %p221 = scmp.ne.s32.totalorder %s213, %s216
      %p222 = scmp.eq.s32.totalorder %s27, 0
      %p223 = por %p221, %p222
      %p224 = scmp.ne.s32.totalorder %s213, %s216
      %p225 = scmp.eq.s32.totalorder %s32, 5
      %p226 = por %p224, %p225
      %p227 = scmp.ne.s32.totalorder %s216, %s217
      %p228 = scmp.eq.s32.totalorder %s32, 0
      %p229 = por %p227, %p228
      %p230 = scmp.ne.s32.totalorder %s216, %s217
      %p231 = scmp.eq.s32.totalorder %s33, 5
      %p232 = por %p230, %p231
      %p234 = scmp.ne.s32.totalorder %s217, %s233
      %p235 = scmp.eq.s32.totalorder %s33, 0
      %p236 = por %p234, %p235
      %s237 = ssub.s32 %s34, %s46
      %p238 = scmp.eq.s32.totalorder %s237, 0
      %s240 = sadd.s32 %s239, 1
      %s241 = scalar_select %p238, %s239, %s240
      %p244 = pneg %p238
      %p245 = scmp.eq.s32.totalorder %s27, 5
      %p246 = por %p244, %p245
      %p247 = scmp.ne.s32.totalorder %s239, %s242
      %p248 = scmp.eq.s32.totalorder %s27, 0
      %p249 = por %p247, %p248
      %p250 = scmp.ne.s32.totalorder %s239, %s242
      %p251 = scmp.eq.s32.totalorder %s32, 5
      %p252 = por %p250, %p251
      %p253 = scmp.ne.s32.totalorder %s242, %s243
      %p254 = scmp.eq.s32.totalorder %s32, 0
      %p255 = por %p253, %p254
      %p256 = scmp.ne.s32.totalorder %s242, %s243
      %p257 = scmp.eq.s32.totalorder %s33, 5
      %p258 = por %p256, %p257
      %p260 = scmp.ne.s32.totalorder %s243, %s259
      %p261 = scmp.eq.s32.totalorder %s33, 0
      %p262 = por %p260, %p261
      %s264 = sadd.s32 %s263, 1
      %p267 = scmp.eq.s32.totalorder %s27, 5
      %p268 = scmp.ne.s32.totalorder %s263, %s265
      %p269 = scmp.eq.s32.totalorder %s27, 0
      %p270 = por %p268, %p269
      %p271 = scmp.ne.s32.totalorder %s263, %s265
      %p272 = scmp.eq.s32.totalorder %s32, 5
      %p273 = por %p271, %p272
      %p274 = scmp.ne.s32.totalorder %s265, %s266
      %p275 = scmp.eq.s32.totalorder %s32, 0
      %p276 = por %p274, %p275
      %p277 = scmp.ne.s32.totalorder %s265, %s266
      %p278 = scmp.eq.s32.totalorder %s33, 5
      %p279 = por %p277, %p278
      %p281 = scmp.ne.s32.totalorder %s266, %s280
      %p282 = scmp.eq.s32.totalorder %s33, 0
      %p283 = por %p281, %p282
      %s285 = sadd.s32 %s284, 1
      %p288 = scmp.eq.s32.totalorder %s27, 5
      %p289 = scmp.ne.s32.totalorder %s284, %s286
      %p290 = scmp.eq.s32.totalorder %s27, 0
      %p291 = por %p289, %p290
      %p292 = scmp.ne.s32.totalorder %s284, %s286
      %p293 = scmp.eq.s32.totalorder %s32, 5
      %p294 = por %p292, %p293
      %p295 = scmp.ne.s32.totalorder %s286, %s287
      %p296 = scmp.eq.s32.totalorder %s32, 0
      %p297 = por %p295, %p296
      %p298 = scmp.ne.s32.totalorder %s286, %s287
      %p299 = scmp.eq.s32.totalorder %s33, 5
      %p300 = por %p298, %p299
      %p302 = scmp.ne.s32.totalorder %s287, %s301
      %p303 = scmp.eq.s32.totalorder %s33, 0
      %p304 = por %p302, %p303
      %s306 = sadd.s32 %s305, 1
      %p309 = scmp.eq.s32.totalorder %s27, 5
      %p310 = scmp.ne.s32.totalorder %s305, %s307
      %p311 = scmp.eq.s32.totalorder %s27, 0
      %p312 = por %p310, %p311
      %p313 = scmp.ne.s32.totalorder %s305, %s307
      %p314 = scmp.eq.s32.totalorder %s32, 5
      %p315 = por %p313, %p314
      %p316 = scmp.ne.s32.totalorder %s307, %s308
      %p317 = scmp.eq.s32.totalorder %s32, 0
      %p318 = por %p316, %p317
      %p319 = scmp.ne.s32.totalorder %s307, %s308
      %p320 = scmp.eq.s32.totalorder %s33, 5
      %p321 = por %p319, %p320
      %p323 = scmp.ne.s32.totalorder %s308, %s322
      %p324 = scmp.eq.s32.totalorder %s33, 0
      %p325 = por %p323, %p324
      %s327 = sadd.s32 %s326, 1
      %p330 = scmp.eq.s32.totalorder %s27, 5
      %p331 = scmp.ne.s32.totalorder %s326, %s328
      %p332 = scmp.eq.s32.totalorder %s27, 0
      %p333 = por %p331, %p332
      %p334 = scmp.ne.s32.totalorder %s326, %s328
      %p335 = scmp.eq.s32.totalorder %s32, 5
      %p336 = por %p334, %p335
      %p337 = scmp.ne.s32.totalorder %s328, %s329
      %p338 = scmp.eq.s32.totalorder %s32, 0
      %p339 = por %p337, %p338
      %p340 = scmp.ne.s32.totalorder %s328, %s329
      %p341 = scmp.eq.s32.totalorder %s33, 5
      %p342 = por %p340, %p341
      %p344 = scmp.ne.s32.totalorder %s329, %s343
      %p345 = scmp.eq.s32.totalorder %s33, 0
      %p346 = por %p344, %p345
      %s348 = sadd.s32 %s347, 1
      %p351 = scmp.eq.s32.totalorder %s27, 5
      %p352 = scmp.ne.s32.totalorder %s347, %s349
      %p353 = scmp.eq.s32.totalorder %s27, 0
      %p354 = por %p352, %p353
      %p355 = scmp.ne.s32.totalorder %s347, %s349
      %p356 = scmp.eq.s32.totalorder %s32, 5
      %p357 = por %p355, %p356
      %p358 = scmp.ne.s32.totalorder %s349, %s350
      %p359 = scmp.eq.s32.totalorder %s32, 0
      %p360 = por %p358, %p359
      %p361 = scmp.ne.s32.totalorder %s349, %s350
      %p362 = scmp.eq.s32.totalorder %s33, 5
      %p363 = por %p361, %p362
      %p365 = scmp.ne.s32.totalorder %s350, %s364
      %p366 = scmp.eq.s32.totalorder %s33, 0
      %p367 = por %p365, %p366
      %p368 = scmp.le.s32.totalorder 1, %s27
      %p369 = scmp.lt.s32.totalorder %s27, 7
      %p370 = pnand %p368, %p369
      %p371 = pneg %p370
      // Predicated region
      $region9: #{tpu_custom_call.1} parent=5 // pred_check
        _
      $region10: #{tpu_custom_call.1} parent=5 // pred_check_branch
        %373 = sbr.rel (%p370) target = $region12
      $region11: #{tpu_custom_call.1} parent=5 // pred_region
        %s374 = ssub.s32 %s27, 1
        // Predicated region
        $region13: #{tpu_custom_call.1} parent=11 // pred_check
          %p375 = pneg %p60
        $region14: #{tpu_custom_call.1} parent=11 // pred_check_branch
          %377 = sbr.rel (%p375) target = $region16
        $region15: #{tpu_custom_call.1} parent=11 // pred_region
          _
        $region16: #{tpu_custom_call.1} parent=11 // pred_fallthru
          _
        // Predicated region
        $region17: #{tpu_custom_call.1} parent=11 // pred_check
          %p378 = pneg %p161
        $region18: #{tpu_custom_call.1} parent=11 // pred_check_branch
          %380 = sbr.rel (%p378) target = $region20
        $region19: #{tpu_custom_call.1} parent=11 // pred_region
          _
        $region20: #{tpu_custom_call.1} parent=11 // pred_fallthru
          _
        // Predicated region
        $region21: #{tpu_custom_call.1} parent=11 // pred_check
          %p381 = pneg %p182
        $region22: #{tpu_custom_call.1} parent=11 // pred_check_branch
          %383 = sbr.rel (%p381) target = $region24
        $region23: #{tpu_custom_call.1} parent=11 // pred_region
          %s385 = ssub.s32 128, 128
          %386 = vsyncadd [#allocation8], %s385
          %s388 = sshll.u32 [#allocation7], 4
          %s389 = int_to_ptr.vmem [resolvable:$true] %s388
          %391 = dma.hbm_to_vmem [thread:$0]  %s5, 128, %s389, [#allocation8]
        $region24: #{tpu_custom_call.1} parent=11 // pred_fallthru
          _
        // Predicated region
        $region25: #{tpu_custom_call.1} parent=11 // pred_check
          %p392 = pneg %p203
        $region26: #{tpu_custom_call.1} parent=11 // pred_check_branch
          %394 = sbr.rel (%p392) target = $region28
        $region27: #{tpu_custom_call.1} parent=11 // pred_region
          %s396 = ssub.s32 16, 16
          %397 = vsyncadd [#allocation8], %s396
          %s399 = sshll.u32 [#allocation9], 4
          %s400 = int_to_ptr.vmem [resolvable:$true] %s399
          %402 = dma.hbm_to_vmem [thread:$0]  %s6, 16, %s400, [#allocation8]
        $region28: #{tpu_custom_call.1} parent=11 // pred_fallthru
          _
        // Predicated region
        $region29: #{tpu_custom_call.1} parent=11 // pred_check
          %p403 = pneg %p276
        $region30: #{tpu_custom_call.1} parent=11 // pred_check_branch
          %405 = sbr.rel (%p403) target = $region32
        $region31: #{tpu_custom_call.1} parent=11 // pred_region
          _
        $region32: #{tpu_custom_call.1} parent=11 // pred_fallthru
          _
        // Predicated region
        $region33: #{tpu_custom_call.1} parent=11 // pred_check
          %p406 = pneg %p297
        $region34: #{tpu_custom_call.1} parent=11 // pred_check_branch
          %408 = sbr.rel (%p406) target = $region36
        $region35: #{tpu_custom_call.1} parent=11 // pred_region
          _
        $region36: #{tpu_custom_call.1} parent=11 // pred_fallthru
          _
        // Predicated region
        $region37: #{tpu_custom_call.1} parent=11 // pred_check
          %p409 = pneg %p318
        $region38: #{tpu_custom_call.1} parent=11 // pred_check_branch
          %411 = sbr.rel (%p409) target = $region40
        $region39: #{tpu_custom_call.1} parent=11 // pred_region
          _
        $region40: #{tpu_custom_call.1} parent=11 // pred_fallthru
          _
        // Predicated region
        $region41: #{tpu_custom_call.1} parent=11 // pred_check
          %p412 = pneg %p339
        $region42: #{tpu_custom_call.1} parent=11 // pred_check_branch
          %414 = sbr.rel (%p412) target = $region44
        $region43: #{tpu_custom_call.1} parent=11 // pred_region
          _
        $region44: #{tpu_custom_call.1} parent=11 // pred_fallthru
          _
      $region12: #{tpu_custom_call.1} parent=5 // pred_fallthru
        _
      %p415 = scmp.lt.s32.totalorder %s27, 6
      // Predicated region
      $region45: #{tpu_custom_call.1} parent=5 // pred_check
        %p416 = pneg %p415
      $region46: #{tpu_custom_call.1} parent=5 // pred_check_branch
        %418 = sbr.rel (%p416) target = $region48
      $region47: #{tpu_custom_call.1} parent=5 // pred_region
        // Predicated region
        $region49: #{tpu_custom_call.1} parent=47 // pred_check
          %p419 = pneg %p80
        $region50: #{tpu_custom_call.1} parent=47 // pred_check_branch
          %421 = sbr.rel (%p419) target = $region52
        $region51: #{tpu_custom_call.1} parent=47 // pred_region
          %s422 = smul.u32 2, %s35
          %p423 = scmp.lt.s32.totalorder %s422, 3
          %s424 = scalar_select %p423, %s422, 3
          %s425 = smul.addr %s424, 4
          %s426 = scalar_lea.vmem %s1, %s425
          %s427 = smul.u32 2, %s35
        $region52: #{tpu_custom_call.1} parent=47 // pred_fallthru
          _
        // Predicated region
        $region53: #{tpu_custom_call.1} parent=47 // pred_check
          %p428 = pneg %p106
        $region54: #{tpu_custom_call.1} parent=47 // pred_check_branch
          %430 = sbr.rel (%p428) target = $region56
        $region55: #{tpu_custom_call.1} parent=47 // pred_region
          %s431 = sand.u32 %s96, 1
          %s432 = scalar_lea.sflag [#allocation5], %s431
          %s433 = sand.u32 %s96, 1
          %s434 = smul.addr %s433, 8
          %s435 = scalar_lea.vmem [#allocation4], %s434
          %s437 = ssub.s32 128, 128
          %438 = vsyncadd %s432, %s437
          %s439 = smul.addr %s35, 2
          %s440 = smul.addr %s439, 64
          %s441 = scalar_lea.hbm %s2, %s440
          %s442 = sshll.u32 %s435, 4
          %s443 = int_to_ptr.vmem [resolvable:$true] %s442
          %448 = dma.hbm_to_vmem [thread:$0]  %s441, 128, %s443, %s432, 64, 64, 4
        $region56: #{tpu_custom_call.1} parent=47 // pred_fallthru
          _
        // Predicated region
        $region57: #{tpu_custom_call.1} parent=47 // pred_check
          %p449 = pneg %p134
        $region58: #{tpu_custom_call.1} parent=47 // pred_check_branch
          %451 = sbr.rel (%p449) target = $region60
        $region59: #{tpu_custom_call.1} parent=47 // pred_region
          %s452 = smul.u32 2, %s35
          %p453 = scmp.lt.s32.totalorder %s34, 2
          %s454 = scalar_select %p453, %s34, 2
          %p455 = scmp.lt.s32.totalorder %s452, 3
          %s456 = scalar_select %p455, %s452, 3
          %s457 = smul.addr %s454, 4
          %s458 = sadd.s32 %s456, %s457
          %s459 = smul.addr %s458, 8
          %s460 = scalar_lea.vmem %s3, %s459
          %s461 = smul.u32 2, %s35
        $region60: #{tpu_custom_call.1} parent=47 // pred_fallthru
          _
        // Predicated region
        $region61: #{tpu_custom_call.1} parent=47 // pred_check
          %p462 = pneg %p223
        $region62: #{tpu_custom_call.1} parent=47 // pred_check_branch
          %464 = sbr.rel (%p462) target = $region64
        $region63: #{tpu_custom_call.1} parent=47 // pred_region
          %s465 = sand.u32 %s27, 1
          %s466 = scalar_lea.sflag [#allocation11], %s465
          %s467 = sand.u32 %s213, 1
          %s468 = smul.addr %s467, 32
          %s469 = scalar_lea.vmem [#allocation10], %s468
          %s471 = ssub.s32 512, 512
          %472 = vsyncadd %s466, %s471
          %s473 = smul.addr %s34, 4
          %s474 = smul.addr %s473, 128
          %s475 = scalar_lea.hbm %s7, %s474
          %s476 = sshll.u32 %s469, 4
          %s477 = int_to_ptr.vmem [resolvable:$true] %s476
          %482 = dma.hbm_to_vmem [thread:$0]  %s475, 512, %s477, %s466, 128, 128, 8
        $region64: #{tpu_custom_call.1} parent=47 // pred_fallthru
          _
        // Predicated region
        $region65: #{tpu_custom_call.1} parent=47 // pred_check
          %p483 = pneg %p249
        $region66: #{tpu_custom_call.1} parent=47 // pred_check_branch
          %485 = sbr.rel (%p483) target = $region68
        $region67: #{tpu_custom_call.1} parent=47 // pred_region
          %s486 = sand.u32 %s27, 1
          %s487 = scalar_lea.sflag [#allocation11], %s486
          %s488 = sand.u32 %s239, 1
          %s489 = scalar_lea.vmem [#allocation12], %s488
          %s491 = ssub.s32 16, 16
          %492 = vsyncadd %s487, %s491
          %s493 = smul.addr %s34, 16
          %s494 = scalar_lea.hbm %s8, %s493
          %s496 = sshll.u32 %s489, 4
          %s497 = int_to_ptr.vmem [resolvable:$true] %s496
          %499 = dma.hbm_to_vmem [thread:$0]  %s494, 16, %s497, %s487
        $region68: #{tpu_custom_call.1} parent=47 // pred_fallthru
          _
      $region48: #{tpu_custom_call.1} parent=5 // pred_fallthru
        _
      %p500 = scmp.le.s32.totalorder 1, %s27
      %p501 = scmp.lt.s32.totalorder %s27, 7
      %p502 = pnand %p500, %p501
      %p503 = pneg %p502
      // Predicated region
      $region69: #{tpu_custom_call.1} parent=5 // pred_check
        _
      $region70: #{tpu_custom_call.1} parent=5 // pred_check_branch
        %505 = sbr.rel (%p502) target = $region72
      $region71: #{tpu_custom_call.1} parent=5 // pred_region
        %s506 = ssub.s32 %s27, 1
        %s507 = sand.u32 %s99, 1
        %s508 = scalar_lea.sflag [#allocation5], %s507
        %s509 = sand.u32 %s99, 1
        %s510 = smul.addr %s509, 8
        %s511 = scalar_lea.vmem [#allocation4], %s510
        // Predicated region
        $region73: #{tpu_custom_call.1} parent=71 // pred_check
          %p512 = pneg %p112
        $region74: #{tpu_custom_call.1} parent=71 // pred_check_branch
          %514 = sbr.rel (%p512) target = $region76
        $region75: #{tpu_custom_call.1} parent=71 // pred_region
          %515 = dma.done %s508, 128
        $region76: #{tpu_custom_call.1} parent=71 // pred_fallthru
          _
        // Predicated region
        $region77: #{tpu_custom_call.1} parent=71 // pred_check
          %p516 = pneg %p182
        $region78: #{tpu_custom_call.1} parent=71 // pred_check_branch
          %518 = sbr.rel (%p516) target = $region80
        $region79: #{tpu_custom_call.1} parent=71 // pred_region
          %519 = dma.done [#allocation8], 128
        $region80: #{tpu_custom_call.1} parent=71 // pred_fallthru
          _
        // Predicated region
        $region81: #{tpu_custom_call.1} parent=71 // pred_check
          %p520 = pneg %p203
        $region82: #{tpu_custom_call.1} parent=71 // pred_check_branch
          %522 = sbr.rel (%p520) target = $region84
        $region83: #{tpu_custom_call.1} parent=71 // pred_region
          %523 = dma.done [#allocation8], 16
        $region84: #{tpu_custom_call.1} parent=71 // pred_fallthru
          _
        %s524 = sand.u32 %s32, 1
        %s525 = scalar_lea.sflag [#allocation11], %s524
        %s526 = sand.u32 %s216, 1
        %s527 = smul.addr %s526, 32
        %s528 = scalar_lea.vmem [#allocation10], %s527
        // Predicated region
        $region85: #{tpu_custom_call.1} parent=71 // pred_check
          %p529 = pneg %p229
        $region86: #{tpu_custom_call.1} parent=71 // pred_check_branch
          %531 = sbr.rel (%p529) target = $region88
        $region87: #{tpu_custom_call.1} parent=71 // pred_region
          %532 = dma.done %s525, 512
        $region88: #{tpu_custom_call.1} parent=71 // pred_fallthru
          _
        %s533 = sand.u32 %s32, 1
        %s534 = scalar_lea.sflag [#allocation11], %s533
        %s535 = sand.u32 %s242, 1
        %s536 = scalar_lea.vmem [#allocation12], %s535
        // Predicated region
        $region89: #{tpu_custom_call.1} parent=71 // pred_check
          %p537 = pneg %p255
        $region90: #{tpu_custom_call.1} parent=71 // pred_check_branch
          %539 = sbr.rel (%p537) target = $region92
        $region91: #{tpu_custom_call.1} parent=71 // pred_region
          %540 = dma.done %s534, 16
        $region92: #{tpu_custom_call.1} parent=71 // pred_fallthru
          _
        %p541 = pneg %p60
        %p542 = pneg %p57
        %s543 = smul.u32 2, %s37
        %p544 = scmp.lt.s32.totalorder %s543, 3
        %s545 = scalar_select %p544, %s543, 3
        %s546 = smul.addr %s545, 4
        %s547 = scalar_lea.vmem %s1, %s546
        %p548 = pneg %p86
        %p549 = pneg %p83
        %s550 = sand.u32 %s99, 1
        %s551 = scalar_lea.sflag [#allocation5], %s550
        %s552 = sand.u32 %s99, 1
        %s553 = smul.addr %s552, 8
        %s554 = scalar_lea.vmem [#allocation4], %s553
        %p555 = pneg %p112
        %p556 = pneg %p109
        %s557 = smul.u32 2, %s37
        %p558 = scmp.lt.s32.totalorder %s36, 2
        %s559 = scalar_select %p558, %s36, 2
        %p560 = scmp.lt.s32.totalorder %s557, 3
        %s561 = scalar_select %p560, %s557, 3
        %s562 = smul.addr %s559, 4
        %s563 = sadd.s32 %s561, %s562
        %s564 = smul.addr %s563, 8
        %s565 = scalar_lea.vmem %s3, %s564
        %p566 = pneg %p140
        %p567 = pneg %p137
        %p568 = pneg %p161
        %p569 = pneg %p158
        %p570 = pneg %p182
        %p571 = pneg %p179
        %p572 = pneg %p203
        %p573 = pneg %p200
        %s574 = sand.u32 %s32, 1
        %s575 = scalar_lea.sflag [#allocation11], %s574
        %s576 = sand.u32 %s216, 1
        %s577 = smul.addr %s576, 32
        %s578 = scalar_lea.vmem [#allocation10], %s577
        %p579 = pneg %p229
        %p580 = pneg %p226
        %s581 = sand.u32 %s32, 1
        %s582 = scalar_lea.sflag [#allocation11], %s581
        %s583 = sand.u32 %s242, 1
        %s584 = scalar_lea.vmem [#allocation12], %s583
        %p585 = pneg %p255
        %p586 = pneg %p252
        %p587 = pneg %p276
        %p588 = pneg %p273
        %p589 = pneg %p297
        %p590 = pneg %p294
        %p591 = pneg %p318
        %p592 = pneg %p315
        %p593 = pneg %p339
        %p594 = pneg %p336
        %p595 = pneg %p360
        %p596 = pneg %p357
        %s597 = smul.u32 2, %s37
        %p598 = scmp.lt.s32.totalorder %s597, 3
        %s599 = scalar_select %p598, %s597, 3
        %s600 = smul.addr %s599, 4
        %s601 = scalar_lea.vmem %s1, %s600
        %s602 = smul.u32 2, %s37
        %s603 = smul.u32 2, %s37
        %p604 = scmp.lt.s32.totalorder %s36, 2
        %s605 = scalar_select %p604, %s36, 2
        %p606 = scmp.lt.s32.totalorder %s603, 3
        %s607 = scalar_select %p606, %s603, 3
        %s608 = smul.addr %s605, 4
        %s609 = sadd.s32 %s607, %s608
        %s610 = smul.addr %s609, 8
        %s611 = scalar_lea.vmem %s3, %s610
        %s612 = smul.u32 2, %s37
        %p613 = scmp.eq.s32.totalorder %s36, 0
        %p614 = scmp.eq.s32.totalorder %s37, 0
        %p615 = pnand %p613, %p614
        %p616 = pneg %p615
        // Predicated region
        $region93: #{tpu_custom_call.1} parent=71 // pred_check
          _
        $region94: #{tpu_custom_call.1} parent=71 // pred_check_branch
          %618 = sbr.rel (%p615) target = $region96
        $region95: #{tpu_custom_call.1} parent=71 // pred_region
          %v619 = vld [vmem:[%s0] sm:$0xff]
          %v620 = vld [vmem:[%s0 + $0x8] sm:$0xff]
          %v621 = vld [vmem:[#allocation7] sm:$0x1f]
          %v622 = vld [vmem:[#allocation9] sm:$0x1]
          %v624 = vlaneseq
          %v625 = vshrl.u32 %v624, 7
          %v626 = vsub.s32 0, %v625
          %v627 = vrot.slane %v622, %v626
          %vm629 = vcmask 39936
          %v631 = vsel %vm629, %v619, 0
          %v634 = vsel %vm629, %v620, 0
          %vm636 = vcmask 1044480
          %v638 = vsel %vm636, %v621, 0
          %640 = vmatprep.subr.mxu0 0.0
          %641 = vmatpush1.msra.mxu0 %v638
          %642 = vmatprep.subr.mxu0 0.0
          %643 = vmatpush1.msra.mxu0 0.0
          %644 = vmatprep.subr.mxu0 0.0
          %645 = vmatpush1.msra.mxu0 0.0
          %646 = vmatprep.subr.mxu0 0.0
          %647 = vmatpush1.msra.mxu0 0.0
          %648 = vmatprep.subr.mxu0 0.0
          %649 = vmatpush1.msra.mxu0 0.0
          %650 = vmatprep.subr.mxu0 0.0
          %651 = vmatpush1.msra.mxu0 0.0
          %652 = vmatprep.subr.mxu0 0.0
          %653 = vmatpush1.msra.mxu0 0.0
          %654 = vmatprep.subr.mxu0 0.0
          %655 = vmatpush1.msra.mxu0 0.0
          %656 = vmatprep.subr.mxu0 0.0
          %657 = vmatpush1.msra.mxu0 0.0
          %658 = vmatprep.subr.mxu0 0.0
          %659 = vmatpush1.msra.mxu0 0.0
          %660 = vmatprep.subr.mxu0 0.0
          %661 = vmatpush1.msra.mxu0 0.0
          %662 = vmatprep.subr.mxu0 0.0
          %663 = vmatpush1.msra.mxu0 0.0
          %664 = vmatprep.subr.mxu0 0.0
          %665 = vmatpush1.msra.mxu0 0.0
          %666 = vmatprep.subr.mxu0 0.0
          %667 = vmatpush1.msra.mxu0 0.0
          %668 = vmatprep.subr.mxu0 0.0
          %669 = vmatpush1.msra.mxu0 0.0
          %670 = vmatprep.subr.mxu0 0.0
          %671 = vmatpush1.msra.mxu0 0.0
          %672 = vmatprep.subr.mxu0 0.0
          %673 = vmatpush1.msra.mxu0 0.0
          %674 = vmatprep.subr.mxu0 0.0
          %675 = vmatpush1.msra.mxu0 0.0
          %676 = vmatprep.subr.mxu0 0.0
          %677 = vmatpush1.msra.mxu0 0.0
          %678 = vmatprep.subr.mxu0 0.0
          %679 = vmatpush1.msra.mxu0 0.0
          %680 = vmatprep.subr.mxu0 0.0
          %681 = vmatpush1.msra.mxu0 0.0
          %682 = vmatprep.subr.mxu0 0.0
          %683 = vmatpush1.msra.mxu0 0.0
          %684 = vmatprep.subr.mxu0 0.0
          %685 = vmatpush1.msra.mxu0 0.0
          %686 = vmatprep.subr.mxu0 0.0
          %687 = vmatpush1.msra.mxu0 0.0
          %688 = vmatprep.subr.mxu0 0.0
          %689 = vmatpush1.msra.mxu0 0.0
          %690 = vmatprep.subr.mxu0 0.0
          %691 = vmatpush1.msra.mxu0 0.0
          %692 = vmatprep.subr.mxu0 0.0
          %693 = vmatpush1.msra.mxu0 0.0
          %694 = vmatprep.subr.mxu0 0.0
          %695 = vmatpush1.msra.mxu0 0.0
          %696 = vmatprep.subr.mxu0 0.0
          %697 = vmatpush1.msra.mxu0 0.0
          %698 = vmatprep.subr.mxu0 0.0
          %699 = vmatpush1.msra.mxu0 0.0
          %700 = vmatprep.subr.mxu0 0.0
          %701 = vmatpush1.msra.mxu0 0.0
          %702 = vmatprep.subr.mxu0 0.0
          %703 = vmatpush1.msra.mxu0 0.0
          %704 = vmatprep.mubr.f32.mxu0 0.0
          %705 = vmatmul.mubr.f32.gmra.mrb[0].mxu0 %v631
          %v706 = vpop.f32.mrb[0].mxu0
          %v707 = vadd.f32 %v627, %v706
          %v708 = vpop.f32.mrb[0].mxu0
          %709 = vmatprep.mubr.f32.mxu0 0.0
          %710 = vmatmul.mubr.f32.gmra.mrb[0].mxu0 %v634
          %v711 = vpop.f32.mrb[0].mxu0
          %v712 = vadd.f32 %v627, %v711
          %v713 = vpop.f32.mrb[0].mxu0
          %714 = vdwg.mxu0
          %v715 = vmax.f32 %v707, 0.0
          %v716 = vmax.f32 %v712, 0.0
          %vm717 = vcmask 261120
          %718 = vst.msk [vmem:[#allocation2] sm:$0xff] %vm717, %v715
          %719 = vst.msk [vmem:[#allocation2 + $0x8] sm:$0xff] %vm717, %v716
        $region96: #{tpu_custom_call.1} parent=71 // pred_fallthru
          _
        // Predicated region
        $region97: #{tpu_custom_call.1} parent=71 // pred_check
          %p720 = pneg %p614
        $region98: #{tpu_custom_call.1} parent=71 // pred_check_branch
          %722 = sbr.rel (%p720) target = $region100
        $region99: #{tpu_custom_call.1} parent=71 // pred_region
          %vm723 = vcmask 261120
          %724 = vst.msk [vmem:[#allocation3] sm:$0xff] %vm723, 0.0
          %725 = vst.msk [vmem:[#allocation3 + $0x8] sm:$0xff] %vm723, 0.0
        $region100: #{tpu_custom_call.1} parent=71 // pred_fallthru
          _
        %v726 = vld [vmem:[#allocation2] sm:$0xff]
        %v727 = vld [vmem:[#allocation2 + $0x8] sm:$0xff]
        %v728 = vld [vmem:[%s601] sm:$0xf]
        %v729 = vld [vmem:[%s601 + $0x4] sm:$0xf]
        %v730 = vunpack.c.l.bf16 %v728
        %v731 = vunpack.c.l.bf16 %v729
        %v732 = vld [vmem:[%s511] sm:$0xf]
        %v733 = vld [vmem:[%s511 + $0x4] sm:$0xf]
        %v734 = vunpack.c.l.bf16 %v732
        %v735 = vunpack.c.l.bf16 %v733
        %v736 = vld [vmem:[%s611] sm:$0xff]
        %v737 = vld [vmem:[%s611 + $0x8] sm:$0xff]
        %vm738 = vcmask 130048
        %v740 = vsel %vm738, %v730, 0
        %v743 = vsel %vm738, %v731, 0
        %745 = vmatprep.subr.mxu0 0.0
        %746 = vmatpush1.msra.mxu0 %v726
        %747 = vmatprep.subr.mxu0 0.0
        %748 = vmatpush1.msra.mxu0 %v727
        %749 = vmatprep.subr.mxu0 0.0
        %750 = vmatpush1.msra.mxu0 0.0
        %751 = vmatprep.subr.mxu0 0.0
        %752 = vmatpush1.msra.mxu0 0.0
        %753 = vmatprep.subr.mxu0 0.0
        %754 = vmatpush1.msra.mxu0 0.0
        %755 = vmatprep.subr.mxu0 0.0
        %756 = vmatpush1.msra.mxu0 0.0
        %757 = vmatprep.subr.mxu0 0.0
        %758 = vmatpush1.msra.mxu0 0.0
        %759 = vmatprep.subr.mxu0 0.0
        %760 = vmatpush1.msra.mxu0 0.0
        %761 = vmatprep.subr.mxu0 0.0
        %762 = vmatpush1.msra.mxu0 0.0
        %763 = vmatprep.subr.mxu0 0.0
        %764 = vmatpush1.msra.mxu0 0.0
        %765 = vmatprep.subr.mxu0 0.0
        %766 = vmatpush1.msra.mxu0 0.0
        %767 = vmatprep.subr.mxu0 0.0
        %768 = vmatpush1.msra.mxu0 0.0
        %769 = vmatprep.subr.mxu0 0.0
        %770 = vmatpush1.msra.mxu0 0.0
        %771 = vmatprep.subr.mxu0 0.0
        %772 = vmatpush1.msra.mxu0 0.0
        %773 = vmatprep.subr.mxu0 0.0
        %774 = vmatpush1.msra.mxu0 0.0
        %775 = vmatprep.subr.mxu0 0.0
        %776 = vmatpush1.msra.mxu0 0.0
        %777 = vmatprep.subr.mxu0 0.0
        %778 = vmatpush1.msra.mxu0 0.0
        %779 = vmatprep.subr.mxu0 0.0
        %780 = vmatpush1.msra.mxu0 0.0
        %781 = vmatprep.subr.mxu0 0.0
        %782 = vmatpush1.msra.mxu0 0.0
        %783 = vmatprep.subr.mxu0 0.0
        %784 = vmatpush1.msra.mxu0 0.0
        %785 = vmatprep.subr.mxu0 0.0
        %786 = vmatpush1.msra.mxu0 0.0
        %787 = vmatprep.subr.mxu0 0.0
        %788 = vmatpush1.msra.mxu0 0.0
        %789 = vmatprep.subr.mxu0 0.0
        %790 = vmatpush1.msra.mxu0 0.0
        %791 = vmatprep.subr.mxu0 0.0
        %792 = vmatpush1.msra.mxu0 0.0
        %793 = vmatprep.subr.mxu0 0.0
        %794 = vmatpush1.msra.mxu0 0.0
        %795 = vmatprep.subr.mxu0 0.0
        %796 = vmatpush1.msra.mxu0 0.0
        %797 = vmatprep.subr.mxu0 0.0
        %798 = vmatpush1.msra.mxu0 0.0
        %799 = vmatprep.subr.mxu0 0.0
        %800 = vmatpush1.msra.mxu0 0.0
        %801 = vmatprep.subr.mxu0 0.0
        %802 = vmatpush1.msra.mxu0 0.0
        %803 = vmatprep.subr.mxu0 0.0
        %804 = vmatpush1.msra.mxu0 0.0
        %805 = vmatprep.subr.mxu0 0.0
        %806 = vmatpush1.msra.mxu0 0.0
        %807 = vmatprep.subr.mxu0 0.0
        %808 = vmatpush1.msra.mxu0 0.0
        %809 = vmatprep.mubr.f32.mxu0 0.0
        %810 = vmatmul.mubr.f32.gmra.mrb[0].mxu0 %v740
        %v811 = vpop.f32.mrb[0].mxu0
        %v812 = vadd.f32 %v736, %v811
        %v813 = vpop.f32.mrb[0].mxu0
        %814 = vmatprep.mubr.f32.mxu0 0.0
        %815 = vmatmul.mubr.f32.gmra.mrb[0].mxu0 %v743
        %v816 = vpop.f32.mrb[0].mxu0
        %v817 = vadd.f32 %v737, %v816
        %v818 = vpop.f32.mrb[0].mxu0
        %819 = vdwg.mxu0
        %v820 = vmax.f32 %v812, 0.0
        %v821 = vmax.f32 %v817, 0.0
        %v822 = vld [vmem:[#allocation3] sm:$0xff]
        %v823 = vld [vmem:[#allocation3 + $0x8] sm:$0xff]
        %v825 = vsel %vm738, %v734, 0
        %v828 = vsel %vm738, %v735, 0
        %830 = vmatprep.subr.mxu0 0.0
        %831 = vmatpush1.msra.mxu0 %v820
        %832 = vmatprep.subr.mxu0 0.0
        %833 = vmatpush1.msra.mxu0 %v821
        %834 = vmatprep.subr.mxu0 0.0
        %835 = vmatpush1.msra.mxu0 0.0
        %836 = vmatprep.subr.mxu0 0.0
        %837 = vmatpush1.msra.mxu0 0.0
        %838 = vmatprep.subr.mxu0 0.0
        %839 = vmatpush1.msra.mxu0 0.0
        %840 = vmatprep.subr.mxu0 0.0
        %841 = vmatpush1.msra.mxu0 0.0
        %842 = vmatprep.subr.mxu0 0.0
        %843 = vmatpush1.msra.mxu0 0.0
        %844 = vmatprep.subr.mxu0 0.0
        %845 = vmatpush1.msra.mxu0 0.0
        %846 = vmatprep.subr.mxu0 0.0
        %847 = vmatpush1.msra.mxu0 0.0
        %848 = vmatprep.subr.mxu0 0.0
        %849 = vmatpush1.msra.mxu0 0.0
        %850 = vmatprep.subr.mxu0 0.0
        %851 = vmatpush1.msra.mxu0 0.0
        %852 = vmatprep.subr.mxu0 0.0
        %853 = vmatpush1.msra.mxu0 0.0
        %854 = vmatprep.subr.mxu0 0.0
        %855 = vmatpush1.msra.mxu0 0.0
        %856 = vmatprep.subr.mxu0 0.0
        %857 = vmatpush1.msra.mxu0 0.0
        %858 = vmatprep.subr.mxu0 0.0
        %859 = vmatpush1.msra.mxu0 0.0
        %860 = vmatprep.subr.mxu0 0.0
        %861 = vmatpush1.msra.mxu0 0.0
        %862 = vmatprep.subr.mxu0 0.0
        %863 = vmatpush1.msra.mxu0 0.0
        %864 = vmatprep.subr.mxu0 0.0
        %865 = vmatpush1.msra.mxu0 0.0
        %866 = vmatprep.subr.mxu0 0.0
        %867 = vmatpush1.msra.mxu0 0.0
        %868 = vmatprep.subr.mxu0 0.0
        %869 = vmatpush1.msra.mxu0 0.0
        %870 = vmatprep.subr.mxu0 0.0
        %871 = vmatpush1.msra.mxu0 0.0
        %872 = vmatprep.subr.mxu0 0.0
        %873 = vmatpush1.msra.mxu0 0.0
        %874 = vmatprep.subr.mxu0 0.0
        %875 = vmatpush1.msra.mxu0 0.0
        %876 = vmatprep.subr.mxu0 0.0
        %877 = vmatpush1.msra.mxu0 0.0
        %878 = vmatprep.subr.mxu0 0.0
        %879 = vmatpush1.msra.mxu0 0.0
        %880 = vmatprep.subr.mxu0 0.0
        %881 = vmatpush1.msra.mxu0 0.0
        %882 = vmatprep.subr.mxu0 0.0
        %883 = vmatpush1.msra.mxu0 0.0
        %884 = vmatprep.subr.mxu0 0.0
        %885 = vmatpush1.msra.mxu0 0.0
        %886 = vmatprep.subr.mxu0 0.0
        %887 = vmatpush1.msra.mxu0 0.0
        %888 = vmatprep.subr.mxu0 0.0
        %889 = vmatpush1.msra.mxu0 0.0
        %890 = vmatprep.subr.mxu0 0.0
        %891 = vmatpush1.msra.mxu0 0.0
        %892 = vmatprep.subr.mxu0 0.0
        %893 = vmatpush1.msra.mxu0 0.0
        %894 = vmatprep.mubr.f32.mxu0 0.0
        %895 = vmatmul.mubr.f32.gmra.mrb[0].mxu0 %v825
        %v896 = vpop.f32.mrb[0].mxu0
        %v897 = vadd.f32 0.0, %v896
        %v898 = vpop.f32.mrb[0].mxu0
        %899 = vmatprep.mubr.f32.mxu0 0.0
        %900 = vmatmul.mubr.f32.gmra.mrb[0].mxu0 %v828
        %v901 = vpop.f32.mrb[0].mxu0
        %v902 = vadd.f32 0.0, %v901
        %v903 = vpop.f32.mrb[0].mxu0
        %904 = vdwg.mxu0
        %v905 = vadd.f32 %v822, %v897
        %v906 = vadd.f32 %v823, %v902
        %vm907 = vcmask 261120
        %908 = vst.msk [vmem:[#allocation3] sm:$0xff] %vm907, %v905
        %909 = vst.msk [vmem:[#allocation3 + $0x8] sm:$0xff] %vm907, %v906
        %p910 = scmp.eq.s32.totalorder %s37, 1
        // Predicated region
        $region101: #{tpu_custom_call.1} parent=71 // pred_check
          %p911 = pneg %p910
        $region102: #{tpu_custom_call.1} parent=71 // pred_check_branch
          %913 = sbr.rel (%p911) target = $region104
        $region103: #{tpu_custom_call.1} parent=71 // pred_region
          %v914 = vld [vmem:[#allocation2] sm:$0xff]
          %v915 = vld [vmem:[#allocation2 + $0x8] sm:$0xff]
          %v916 = vld [vmem:[#allocation3] sm:$0xff]
          %v917 = vld [vmem:[#allocation3 + $0x8] sm:$0xff]
          %v918 = vadd.f32 %v914, %v916
          %v919 = vadd.f32 %v915, %v917
          %v920 = vld [vmem:[%s528] sm:$0xff]
          %v921 = vld [vmem:[%s528 + $0x8] sm:$0xff]
          %v922 = vld [vmem:[%s528 + $0x10] sm:$0xff]
          %v923 = vld [vmem:[%s528 + $0x18] sm:$0xff]
          %v924 = vld [vmem:[%s536] sm:$0x1]
          %v926 = vlaneseq
          %v927 = vshrl.u32 %v926, 7
          %v928 = vsub.s32 0, %v927
          %v929 = vrot.slane %v924, %v928
          %v932 = vsel %vm907, %v918, 0
          %v935 = vsel %vm907, %v919, 0
          %937 = vmatprep.subr.mxu0 0.0
          %938 = vmatpush1.msra.mxu0 %v920
          %939 = vmatprep.subr.mxu0 0.0
          %940 = vmatpush1.msra.mxu0 %v921
          %941 = vmatprep.subr.mxu0 0.0
          %942 = vmatpush1.msra.mxu0 %v922
          %943 = vmatprep.subr.mxu0 0.0
          %944 = vmatpush1.msra.mxu0 %v923
          %945 = vmatprep.subr.mxu0 0.0
          %946 = vmatpush1.msra.mxu0 0.0
          %947 = vmatprep.subr.mxu0 0.0
          %948 = vmatpush1.msra.mxu0 0.0
          %949 = vmatprep.subr.mxu0 0.0
          %950 = vmatpush1.msra.mxu0 0.0
          %951 = vmatprep.subr.mxu0 0.0
          %952 = vmatpush1.msra.mxu0 0.0
          %953 = vmatprep.subr.mxu0 0.0
          %954 = vmatpush1.msra.mxu0 0.0
          %955 = vmatprep.subr.mxu0 0.0
          %956 = vmatpush1.msra.mxu0 0.0
          %957 = vmatprep.subr.mxu0 0.0
          %958 = vmatpush1.msra.mxu0 0.0
          %959 = vmatprep.subr.mxu0 0.0
          %960 = vmatpush1.msra.mxu0 0.0
          %961 = vmatprep.subr.mxu0 0.0
          %962 = vmatpush1.msra.mxu0 0.0
          %963 = vmatprep.subr.mxu0 0.0
          %964 = vmatpush1.msra.mxu0 0.0
          %965 = vmatprep.subr.mxu0 0.0
          %966 = vmatpush1.msra.mxu0 0.0
          %967 = vmatprep.subr.mxu0 0.0
          %968 = vmatpush1.msra.mxu0 0.0
          %969 = vmatprep.subr.mxu0 0.0
          %970 = vmatpush1.msra.mxu0 0.0
          %971 = vmatprep.subr.mxu0 0.0
          %972 = vmatpush1.msra.mxu0 0.0
          %973 = vmatprep.subr.mxu0 0.0
          %974 = vmatpush1.msra.mxu0 0.0
          %975 = vmatprep.subr.mxu0 0.0
          %976 = vmatpush1.msra.mxu0 0.0
          %977 = vmatprep.subr.mxu0 0.0
          %978 = vmatpush1.msra.mxu0 0.0
          %979 = vmatprep.subr.mxu0 0.0
          %980 = vmatpush1.msra.mxu0 0.0
          %981 = vmatprep.subr.mxu0 0.0
          %982 = vmatpush1.msra.mxu0 0.0
          %983 = vmatprep.subr.mxu0 0.0
          %984 = vmatpush1.msra.mxu0 0.0
          %985 = vmatprep.subr.mxu0 0.0
          %986 = vmatpush1.msra.mxu0 0.0
          %987 = vmatprep.subr.mxu0 0.0
          %988 = vmatpush1.msra.mxu0 0.0
          %989 = vmatprep.subr.mxu0 0.0
          %990 = vmatpush1.msra.mxu0 0.0
          %991 = vmatprep.subr.mxu0 0.0
          %992 = vmatpush1.msra.mxu0 0.0
          %993 = vmatprep.subr.mxu0 0.0
          %994 = vmatpush1.msra.mxu0 0.0
          %995 = vmatprep.subr.mxu0 0.0
          %996 = vmatpush1.msra.mxu0 0.0
          %997 = vmatprep.subr.mxu0 0.0
          %998 = vmatpush1.msra.mxu0 0.0
          %999 = vmatprep.subr.mxu0 0.0
          %1000 = vmatpush1.msra.mxu0 0.0
          %1001 = vmatprep.mubr.f32.mxu0 0.0
          %1002 = vmatmul.mubr.f32.gmra.mrb[0].mxu0 %v932
          %v1003 = vpop.f32.mrb[0].mxu0
          %v1004 = vadd.f32 %v929, %v1003
          %v1005 = vpop.f32.mrb[0].mxu0
          %1006 = vmatprep.mubr.f32.mxu0 0.0
          %1007 = vmatmul.mubr.f32.gmra.mrb[0].mxu0 %v935
          %v1008 = vpop.f32.mrb[0].mxu0
          %v1009 = vadd.f32 %v929, %v1008
          %v1010 = vpop.f32.mrb[0].mxu0
          %1011 = vdwg.mxu0
          %v1012 = vmax.f32 %v1004, 0.0
          %v1013 = vmax.f32 %v1009, 0.0
          %v1014 = vsel %vm907, %v1012, 0.0
          %v1015 = vsel %vm907, %v1013, 0.0
          %v1016 = vadd.f32 %v1014, %v1015
          %v1017 = vrot.slane %v1016, 4
          %v1018 = vadd.f32 %v1016, %v1017
          %v1019 = vrot.slane %v1018, 2
          %v1020 = vadd.f32 %v1018, %v1019
          %v1021 = vrot.slane %v1020, 1
          %v1022 = vadd.f32 %v1020, %v1021
          %v1023 = vrcp.pop 16.0
          %v1024 = vmul.f32 %v1022, %v1023
          %v1025 = vsub.f32 %v1012, %v1024
          %v1026 = vsub.f32 %v1013, %v1024
          %v1027 = vmul.f32 %v1025, %v1025
          %v1028 = vmul.f32 %v1026, %v1026
          %v1029 = vsel %vm907, %v1027, 0.0
          %1030 = vadd.xlane.f32.xlu0 %v1029
          %v1031 = vpop.xlane.xlu0 %1030
          %v1032 = vsel %vm907, %v1028, 0.0
          %1033 = vadd.xlane.f32.xlu0 %v1032
          %v1034 = vpop.xlane.xlu0 %1033
          %vm1035 = vcmask 7168
          %v1036 = vsel %vm1035, %v1031, 0.0
          %v1037 = vsel %vm1035, %v1034, 0.0
          %v1038 = vadd.f32 %v1036, %v1037
          %1039 = vadd.xlane.f32.xlu0 %v1038
          %v1040 = vpop.xlane.xlu0 %1039
          %v1041 = vrot.slane %v1040, 4
          %v1042 = vadd.f32 %v1040, %v1041
          %v1043 = vrot.slane %v1042, 2
          %v1044 = vadd.f32 %v1042, %v1043
          %v1045 = vrot.slane %v1044, 1
          %v1046 = vadd.f32 %v1044, %v1045
          %s1047 = vtos %v1046
          %v1048 = vrcp.pop 16.0
          %s1049 = vtos %v1048
          %s1050 = smul.f32 %s1047, %s1049
          %s1051 = sadd.f32 %s1050, 1e-05
          %v1052 = vstv %s1051
          %v1053 = vrsqrt.pop %v1052
          %s1054 = vtos %v1053
          %v1055 = vstv %s1054
          %v1056 = vmul.f32 %v1025, %v1055
          %v1057 = vmul.f32 %v1026, %v1055
          %1058 = vst.msk [vmem:[#allocation2] sm:$0xff] %vm907, %v1056
          %1059 = vst.msk [vmem:[#allocation2 + $0x8] sm:$0xff] %vm907, %v1057
        $region104: #{tpu_custom_call.1} parent=71 // pred_fallthru
          _
        %p1060 = scmp.eq.s32.totalorder %s36, 2
        %p1061 = pnand %p1060, %p910
        %p1062 = pneg %p1061
        // Predicated region
        $region105: #{tpu_custom_call.1} parent=71 // pred_check
          _
        $region106: #{tpu_custom_call.1} parent=71 // pred_check_branch
          %1064 = sbr.rel (%p1061) target = $region108
        $region107: #{tpu_custom_call.1} parent=71 // pred_region
          %v1065 = vld [vmem:[#allocation2] sm:$0xff]
          %v1066 = vld [vmem:[#allocation2 + $0x8] sm:$0xff]
          %v1067 = vld [vmem:[%s4] sm:$0xff]
          %v1068 = vld [vmem:[%s4 + $0x8] sm:$0xff]
          %vm1069 = vcmp.gt.f32.partialorder %v1067, 0.5
          %vm1070 = vcmp.gt.f32.partialorder %v1068, 0.5
          %v1071 = vsel %vm1069, 1, 0
          %v1072 = vsel %vm1070, 1, 0
          %1073 = vset.pattern.permute.xlu0 0
          %1074 = vperm.xlu0 %1073, %v1071
          %v1075 = vpop.permute.xlu0 %1074
          %1076 = vset.pattern.permute.xlu0 0
          %1077 = vperm.xlu0 %1076, %v1072
          %v1078 = vpop.permute.xlu0 %1077
          %vm1079 = vcmp.eq.s32.totalorder %v1075, 1
          %vm1080 = vcmp.eq.s32.totalorder %v1078, 1
          %v1081 = vsel %vm1079, %v1065, -1e+30
          %v1082 = vsel %vm1080, %v1066, -1e+30
          %v1083 = vsel %vm907, %v1081, -inf
          %v1084 = vsel %vm907, %v1082, -inf
          %v1085 = vmax.f32 %v1083, %v1084
          %v1086 = vrot.slane %v1085, 4
          %v1087 = vmax.f32 %v1085, %v1086
          %v1088 = vrot.slane %v1087, 2
          %v1089 = vmax.f32 %v1087, %v1088
          %v1090 = vrot.slane %v1089, 1
          %v1091 = vmax.f32 %v1089, %v1090
          %1092 = vset.pattern.permute.xlu0 1
          %1093 = vperm.xlu0 %1092, %v1071
          %v1094 = vpop.permute.xlu0 %1093
          %1095 = vset.pattern.permute.xlu0 1
          %1096 = vperm.xlu0 %1095, %v1072
          %v1097 = vpop.permute.xlu0 %1096
          %vm1098 = vcmp.eq.s32.totalorder %v1094, 1
          %vm1099 = vcmp.eq.s32.totalorder %v1097, 1
          %v1100 = vsel %vm1098, %v1065, -1e+30
          %v1101 = vsel %vm1099, %v1066, -1e+30
          %v1102 = vsel %vm907, %v1100, -inf
          %v1103 = vsel %vm907, %v1101, -inf
          %v1104 = vmax.f32 %v1102, %v1103
          %v1105 = vrot.slane %v1104, 4
          %v1106 = vmax.f32 %v1104, %v1105
          %v1107 = vrot.slane %v1106, 2
          %v1108 = vmax.f32 %v1106, %v1107
          %v1109 = vrot.slane %v1108, 1
          %v1110 = vmax.f32 %v1108, %v1109
          %vm1111 = vcmask 1040384
          %v1112 = vsel %vm1111, %v1091, %v1110
          %v1113 = vld [vmem:[%s9] sm:$0xff]
          %v1114 = vld [vmem:[%s9 + $0x8] sm:$0xff]
          %v1115 = vld [vmem:[%s9 + $0x10] sm:$0xff]
          %v1116 = vld [vmem:[%s9 + $0x18] sm:$0xff]
          %v1117 = vld [vmem:[%s10] sm:$0x1]
          %v1119 = vlaneseq
          %v1120 = vshrl.u32 %v1119, 7
          %v1121 = vsub.s32 0, %v1120
          %v1122 = vrot.slane %v1117, %v1121
          %v1125 = vsel %vm907, %v1112, 0
          %1127 = vmatprep.subr.mxu0 0.0
          %1128 = vmatpush1.msra.mxu0 %v1113
          %1129 = vmatprep.subr.mxu0 0.0
          %1130 = vmatpush1.msra.mxu0 %v1114
          %1131 = vmatprep.subr.mxu0 0.0
          %1132 = vmatpush1.msra.mxu0 %v1115
          %1133 = vmatprep.subr.mxu0 0.0
          %1134 = vmatpush1.msra.mxu0 %v1116
          %1135 = vmatprep.subr.mxu0 0.0
          %1136 = vmatpush1.msra.mxu0 0.0
          %1137 = vmatprep.subr.mxu0 0.0
          %1138 = vmatpush1.msra.mxu0 0.0
          %1139 = vmatprep.subr.mxu0 0.0
          %1140 = vmatpush1.msra.mxu0 0.0
          %1141 = vmatprep.subr.mxu0 0.0
          %1142 = vmatpush1.msra.mxu0 0.0
          %1143 = vmatprep.subr.mxu0 0.0
          %1144 = vmatpush1.msra.mxu0 0.0
          %1145 = vmatprep.subr.mxu0 0.0
          %1146 = vmatpush1.msra.mxu0 0.0
          %1147 = vmatprep.subr.mxu0 0.0
          %1148 = vmatpush1.msra.mxu0 0.0
          %1149 = vmatprep.subr.mxu0 0.0
          %1150 = vmatpush1.msra.mxu0 0.0
          %1151 = vmatprep.subr.mxu0 0.0
          %1152 = vmatpush1.msra.mxu0 0.0
          %1153 = vmatprep.subr.mxu0 0.0
          %1154 = vmatpush1.msra.mxu0 0.0
          %1155 = vmatprep.subr.mxu0 0.0
          %1156 = vmatpush1.msra.mxu0 0.0
          %1157 = vmatprep.subr.mxu0 0.0
          %1158 = vmatpush1.msra.mxu0 0.0
          %1159 = vmatprep.subr.mxu0 0.0
          %1160 = vmatpush1.msra.mxu0 0.0
          %1161 = vmatprep.subr.mxu0 0.0
          %1162 = vmatpush1.msra.mxu0 0.0
          %1163 = vmatprep.subr.mxu0 0.0
          %1164 = vmatpush1.msra.mxu0 0.0
          %1165 = vmatprep.subr.mxu0 0.0
          %1166 = vmatpush1.msra.mxu0 0.0
          %1167 = vmatprep.subr.mxu0 0.0
          %1168 = vmatpush1.msra.mxu0 0.0
          %1169 = vmatprep.subr.mxu0 0.0
          %1170 = vmatpush1.msra.mxu0 0.0
          %1171 = vmatprep.subr.mxu0 0.0
          %1172 = vmatpush1.msra.mxu0 0.0
          %1173 = vmatprep.subr.mxu0 0.0
          %1174 = vmatpush1.msra.mxu0 0.0
          %1175 = vmatprep.subr.mxu0 0.0
          %1176 = vmatpush1.msra.mxu0 0.0
          %1177 = vmatprep.subr.mxu0 0.0
          %1178 = vmatpush1.msra.mxu0 0.0
          %1179 = vmatprep.subr.mxu0 0.0
          %1180 = vmatpush1.msra.mxu0 0.0
          %1181 = vmatprep.subr.mxu0 0.0
          %1182 = vmatpush1.msra.mxu0 0.0
          %1183 = vmatprep.subr.mxu0 0.0
          %1184 = vmatpush1.msra.mxu0 0.0
          %1185 = vmatprep.subr.mxu0 0.0
          %1186 = vmatpush1.msra.mxu0 0.0
          %1187 = vmatprep.subr.mxu0 0.0
          %1188 = vmatpush1.msra.mxu0 0.0
          %1189 = vmatprep.subr.mxu0 0.0
          %1190 = vmatpush1.msra.mxu0 0.0
          %1191 = vmatprep.mubr.f32.mxu0 0.0
          %1192 = vmatmul.mubr.f32.gmra.mrb[0].mxu0 %v1125
          %v1193 = vpop.f32.mrb[0].mxu0
          %v1194 = vadd.f32 %v1122, %v1193
          %v1195 = vpop.f32.mrb[0].mxu0
          %1196 = vdwg.mxu0
          %v1197 = vmax.f32 %v1194, 0.0
          %v1198 = vld [vmem:[%s11] sm:$0xff]
          %v1199 = vld [vmem:[%s11 + $0x8] sm:$0xff]
          %v1200 = vld [vmem:[%s11 + $0x10] sm:$0xff]
          %v1201 = vld [vmem:[%s11 + $0x18] sm:$0xff]
          %v1202 = vld [vmem:[%s12] sm:$0x1]
          %v1204 = vlaneseq
          %v1205 = vshrl.u32 %v1204, 7
          %v1206 = vsub.s32 0, %v1205
          %v1207 = vrot.slane %v1202, %v1206
          %v1210 = vsel %vm907, %v1197, 0
          %1212 = vmatprep.subr.mxu0 0.0
          %1213 = vmatpush1.msra.mxu0 %v1198
          %1214 = vmatprep.subr.mxu0 0.0
          %1215 = vmatpush1.msra.mxu0 %v1199
          %1216 = vmatprep.subr.mxu0 0.0
          %1217 = vmatpush1.msra.mxu0 %v1200
          %1218 = vmatprep.subr.mxu0 0.0
          %1219 = vmatpush1.msra.mxu0 %v1201
          %1220 = vmatprep.subr.mxu0 0.0
          %1221 = vmatpush1.msra.mxu0 0.0
          %1222 = vmatprep.subr.mxu0 0.0
          %1223 = vmatpush1.msra.mxu0 0.0
          %1224 = vmatprep.subr.mxu0 0.0
          %1225 = vmatpush1.msra.mxu0 0.0
          %1226 = vmatprep.subr.mxu0 0.0
          %1227 = vmatpush1.msra.mxu0 0.0
          %1228 = vmatprep.subr.mxu0 0.0
          %1229 = vmatpush1.msra.mxu0 0.0
          %1230 = vmatprep.subr.mxu0 0.0
          %1231 = vmatpush1.msra.mxu0 0.0
          %1232 = vmatprep.subr.mxu0 0.0
          %1233 = vmatpush1.msra.mxu0 0.0
          %1234 = vmatprep.subr.mxu0 0.0
          %1235 = vmatpush1.msra.mxu0 0.0
          %1236 = vmatprep.subr.mxu0 0.0
          %1237 = vmatpush1.msra.mxu0 0.0
          %1238 = vmatprep.subr.mxu0 0.0
          %1239 = vmatpush1.msra.mxu0 0.0
          %1240 = vmatprep.subr.mxu0 0.0
          %1241 = vmatpush1.msra.mxu0 0.0
          %1242 = vmatprep.subr.mxu0 0.0
          %1243 = vmatpush1.msra.mxu0 0.0
          %1244 = vmatprep.subr.mxu0 0.0
          %1245 = vmatpush1.msra.mxu0 0.0
          %1246 = vmatprep.subr.mxu0 0.0
          %1247 = vmatpush1.msra.mxu0 0.0
          %1248 = vmatprep.subr.mxu0 0.0
          %1249 = vmatpush1.msra.mxu0 0.0
          %1250 = vmatprep.subr.mxu0 0.0
          %1251 = vmatpush1.msra.mxu0 0.0
          %1252 = vmatprep.subr.mxu0 0.0
          %1253 = vmatpush1.msra.mxu0 0.0
          %1254 = vmatprep.subr.mxu0 0.0
          %1255 = vmatpush1.msra.mxu0 0.0
          %1256 = vmatprep.subr.mxu0 0.0
          %1257 = vmatpush1.msra.mxu0 0.0
          %1258 = vmatprep.subr.mxu0 0.0
          %1259 = vmatpush1.msra.mxu0 0.0
          %1260 = vmatprep.subr.mxu0 0.0
          %1261 = vmatpush1.msra.mxu0 0.0
          %1262 = vmatprep.subr.mxu0 0.0
          %1263 = vmatpush1.msra.mxu0 0.0
          %1264 = vmatprep.subr.mxu0 0.0
          %1265 = vmatpush1.msra.mxu0 0.0
          %1266 = vmatprep.subr.mxu0 0.0
          %1267 = vmatpush1.msra.mxu0 0.0
          %1268 = vmatprep.subr.mxu0 0.0
          %1269 = vmatpush1.msra.mxu0 0.0
          %1270 = vmatprep.subr.mxu0 0.0
          %1271 = vmatpush1.msra.mxu0 0.0
          %1272 = vmatprep.subr.mxu0 0.0
          %1273 = vmatpush1.msra.mxu0 0.0
          %1274 = vmatprep.subr.mxu0 0.0
          %1275 = vmatpush1.msra.mxu0 0.0
          %1276 = vmatprep.mubr.f32.mxu0 0.0
          %1277 = vmatmul.mubr.f32.gmra.mrb[0].mxu0 %v1210
          %v1278 = vpop.f32.mrb[0].mxu0
          %v1279 = vadd.f32 %v1207, %v1278
          %v1280 = vpop.f32.mrb[0].mxu0
          %1281 = vdwg.mxu0
          %vm1282 = vcmask 9216
          %1283 = vst.msk [vmem:[#allocation13] sm:$0x3] %vm1282, %v1279
        $region108: #{tpu_custom_call.1} parent=71 // pred_fallthru
          _
        // Predicated region
        $region109: #{tpu_custom_call.1} parent=71 // pred_check
          %p1284 = pneg %p357
        $region110: #{tpu_custom_call.1} parent=71 // pred_check_branch
          %1286 = sbr.rel (%p1284) target = $region112
        $region111: #{tpu_custom_call.1} parent=71 // pred_region
          %s1288 = ssub.s32 32, 32
          %1289 = vsyncadd [#allocation6], %s1288
          %s1291 = sshll.u32 [#allocation13], 4
          %s1292 = int_to_ptr.vmem [resolvable:$true] %s1291
          %1294 = dma.vmem_to_hbm [thread:$0]  %s1292, 32, %s13, [#allocation6]
        $region112: #{tpu_custom_call.1} parent=71 // pred_fallthru
          _
        // Predicated region
        $region113: #{tpu_custom_call.1} parent=71 // pred_check
          %p1295 = pneg %p357
        $region114: #{tpu_custom_call.1} parent=71 // pred_check_branch
          %1297 = sbr.rel (%p1295) target = $region116
        $region115: #{tpu_custom_call.1} parent=71 // pred_region
          %1298 = dma.done [#allocation6], 32
        $region116: #{tpu_custom_call.1} parent=71 // pred_fallthru
          _
      $region72: #{tpu_custom_call.1} parent=5 // pred_fallthru
        _
      %p1299 = scmp.le.s32.totalorder 2, %s27
      // Predicated region
      $region117: #{tpu_custom_call.1} parent=5 // pred_check
        %p1300 = pneg %p1299
      $region118: #{tpu_custom_call.1} parent=5 // pred_check_branch
        %1302 = sbr.rel (%p1300) target = $region120
      $region119: #{tpu_custom_call.1} parent=5 // pred_region
        %s1303 = ssub.s32 %s27, 2
      $region120: #{tpu_custom_call.1} parent=5 // pred_fallthru
        _
    $region6: #{tpu_custom_call.1} parent=1 // loop_footer
      %s31 = sadd.s32 1, %s27
    $region7: #{tpu_custom_call.1} parent=1 // loop_footer_branch
      %26 = sbr.rel target = $region3
    $region8: #{tpu_custom_call.1} parent=1 // loop_exit
      _
    %1304 = vsyncpa [#allocation5], 1
    %s1305 = scalar_lea.sflag [#allocation5], 1
    %1306 = vsyncpa %s1305, 1
    %1307 = vsyncpa [#allocation8], 1
    %1308 = vsyncpa [#allocation11], 1
    %s1309 = scalar_lea.sflag [#allocation11], 1
    %1310 = vsyncpa %s1309, 1
    %1311 = vsyncpa [#allocation6], 1
    %s1312 = scalar_lea.sflag [#allocation6], 1
    %1313 = vsyncpa %s1312, 1

</llo_original>
